<compile_context>
chip_gen: v5e
topology: v5e:2x2
jax: 0.10.0
libtpu: 0.0.40
codegen_flags: <defaults>
</compile_context>

<pallas_src>
import jax
import jax.numpy as jnp
from jax import lax
from jax.experimental import pallas as pl
from jax.experimental.pallas import tpu as pltpu

FEAT = 128          # feature width
STREAM_HID = 64     # hidden width of each stream


def _round_up(x, m):
    return ((x + m - 1) // m) * m


def _make_kernel(action_size):
    def kernel(x_ref, w1_ref, wsm_ref, b_ref, q_ref):
        x = x_ref[...]                                   # [TB, Kp] bf16

        b1 = b_ref[0:1, :]                               # [1,128] f32
        b2 = b_ref[1:2, :]
        bc1 = b_ref[2:3, :]
        bc2 = b_ref[3:4, :]

        # feature_layer: Linear -> ReLU -> Linear -> ReLU   (bf16 in, f32 acc)
        h1 = jnp.dot(x, w1_ref[...], preferred_element_type=jnp.float32) + b1
        h1 = jnp.maximum(h1, 0.0).astype(jnp.bfloat16)
        h2 = jnp.dot(h1, wsm_ref[0], preferred_element_type=jnp.float32) + b2
        h2 = jnp.maximum(h2, 0.0).astype(jnp.bfloat16)

        # fused value+advantage streams:
        #   s1 lanes 0..63 = value hidden, lanes 64..127 = advantage hidden
        s1 = jnp.dot(h2, wsm_ref[1], preferred_element_type=jnp.float32) + bc1
        s1 = jnp.maximum(s1, 0.0).astype(jnp.bfloat16)
        #   s2 lanes 0..action_size-1 = advantage, lane action_size = value
        s2 = jnp.dot(s1, wsm_ref[2], preferred_element_type=jnp.float32) + bc2

        lane = lax.broadcasted_iota(jnp.int32, s2.shape, 1)
        a_mask = lane < action_size
        a_sum = jnp.sum(jnp.where(a_mask, s2, 0.0), axis=1, keepdims=True)
        a_mean = a_sum * (1.0 / action_size)
        v = jnp.sum(jnp.where(lane == action_size, s2, 0.0), axis=1, keepdims=True)

        # dueling combine, lane-dense store (valid q in lanes 0..action_size-1)
        q_ref[...] = jnp.where(a_mask, s2 + v - a_mean, 0.0)

    return kernel


def init_params(key, state_size=1089, action_size=10):
    """Deterministic synthetic init. Weights are [in, out]; biases are [1, out]."""
    def linear(key, fan_in, fan_out):
        kw, kb = jax.random.split(key)
        bound = 1.0 / jnp.sqrt(jnp.float32(fan_in))
        w = jax.random.uniform(kw, (fan_in, fan_out), jnp.float32, -bound, bound)
        b = jax.random.uniform(kb, (1, fan_out), jnp.float32, -bound, bound)
        return w, b

    keys = jax.random.split(key, 6)
    w1, b1 = linear(keys[0], state_size, FEAT)
    w2, b2 = linear(keys[1], FEAT, FEAT)
    wv1, bv1 = linear(keys[2], FEAT, STREAM_HID)
    wv2, bv2 = linear(keys[3], STREAM_HID, 1)
    wa1, ba1 = linear(keys[4], FEAT, STREAM_HID)
    wa2, ba2 = linear(keys[5], STREAM_HID, action_size)
    return dict(w1=w1, b1=b1, w2=w2, b2=b2,
                wv1=wv1, bv1=bv1, wv2=wv2, bv2=bv2,
                wa1=wa1, ba1=ba1, wa2=wa2, ba2=ba2)


def prepare_params(params, state_size=1089, action_size=10):
    """Pad/fuse/cast the nn.Linear-style params into the kernel's packed layout."""
    assert action_size + 1 <= FEAT, "fused head needs action_size + 1 <= 128"
    k_pad = _round_up(state_size, 128)

    # K-padded first layer weight (extra rows are zero -> mathematically identical).
    w1 = jnp.zeros((k_pad, FEAT), jnp.float32).at[:state_size].set(params["w1"])

    # Fused stream layer 1: columns 0..63 value-hidden, 64..127 advantage-hidden.
    wc1 = jnp.concatenate([params["wv1"], params["wa1"]], axis=1)        # [128,128]

    # Fused stream layer 2 (block-diagonal, lane-padded to 128):
    #   rows 64..127, cols 0..action_size-1 : wa2     (advantage)
    #   rows  0..63 , col  action_size      : wv2     (value)
    wc2 = jnp.zeros((FEAT, FEAT), jnp.float32)
    wc2 = wc2.at[STREAM_HID:FEAT, 0:action_size].set(params["wa2"])
    wc2 = wc2.at[0:STREAM_HID, action_size:action_size + 1].set(params["wv2"])

    w_small = jnp.stack([params["w2"], wc1, wc2]).astype(jnp.bfloat16)   # [3,128,128]

    # All biases packed into one [4,128] f32 operand.
    biases = jnp.zeros((4, FEAT), jnp.float32)
    biases = biases.at[0].set(params["b1"][0])
    biases = biases.at[1].set(params["b2"][0])
    biases = biases.at[2, 0:STREAM_HID].set(params["bv1"][0])
    biases = biases.at[2, STREAM_HID:FEAT].set(params["ba1"][0])
    biases = biases.at[3, 0:action_size].set(params["ba2"][0])
    biases = biases.at[3, action_size].set(params["bv2"][0, 0])

    return dict(w1=w1.astype(jnp.bfloat16), w_small=w_small, biases=biases,
                state_size=state_size, action_size=action_size, k_pad=k_pad)


def dueling_q_forward(x, prepared, batch_tile=128):
    """x: [B, state_size] float32. Returns [B, action_size] float32."""
    B = x.shape[0]
    state_size = prepared["state_size"]
    action_size = prepared["action_size"]
    k_pad = prepared["k_pad"]

    # Batch tile: multiple of 8, at most `batch_tile`; keep VMEM use modest on v7x.
    bt = min(batch_tile, max(8, _round_up(B, 8)))
    b_pad = _round_up(B, bt)

    # Zero-pad batch and K; cast activations to bf16 (f32 accumulation in-kernel).
    xp = jnp.zeros((b_pad, k_pad), jnp.bfloat16)
    xp = xp.at[:B, :state_size].set(x.astype(jnp.bfloat16))

    grid = (b_pad // bt,)

    w1 = prepared["w1"]
    w_small = prepared["w_small"]
    biases = prepared["biases"]

    flops = 2 * b_pad * (k_pad * FEAT + 3 * FEAT * FEAT)
    bytes_accessed = (xp.size * 2 + w1.size * 2 + w_small.size * 2
                      + biases.size * 4 + b_pad * FEAT * 4)

    out = pl.pallas_call(
        _make_kernel(action_size),
        out_shape=jax.ShapeDtypeStruct((b_pad, FEAT), jnp.float32),
        grid_spec=pltpu.PrefetchScalarGridSpec(
            num_scalar_prefetch=0,
            grid=grid,
            in_specs=[
                pl.BlockSpec((bt, k_pad), lambda i: (i, 0)),        # x: tiled over batch
                pl.BlockSpec((k_pad, FEAT), lambda i: (0, 0)),      # w1: VMEM-resident
                pl.BlockSpec((3, FEAT, FEAT), lambda i: (0, 0, 0)),  # stacked small weights
                pl.BlockSpec((4, FEAT), lambda i: (0, 0)),          # packed biases
            ],
            out_specs=pl.BlockSpec((bt, FEAT), lambda i: (i, 0)),   # lane-dense output
        ),
        compiler_params=pltpu.CompilerParams(
            dimension_semantics=("parallel",)),                     # megacore shard on v7x
        cost_estimate=pl.CostEstimate(flops=flops, transcendentals=0,
                                      bytes_accessed=bytes_accessed),
    )(xp, w1, w_small, biases)

    return out[:B, :action_size]


def dueling_q_forward_ref(x, p):
    """Pure-JAX f32 reference (original un-fused parameters)."""
    h = jnp.maximum(x @ p["w1"] + p["b1"], 0.0)
    h = jnp.maximum(h @ p["w2"] + p["b2"], 0.0)
    v = jnp.maximum(h @ p["wv1"] + p["bv1"], 0.0) @ p["wv2"] + p["bv2"]
    a = jnp.maximum(h @ p["wa1"] + p["ba1"], 0.0) @ p["wa2"] + p["ba2"]
    return v + a - jnp.mean(a, axis=1, keepdims=True)


if __name__ == "__main__":
    state_size = 1089
    action_size = 10
    batch = 256          # replay-batch sized call: amortizes weight DMA + call overhead

    key = jax.random.PRNGKey(0)
    kx, kp = jax.random.split(key)
    x = jax.random.normal(kx, (batch, state_size), dtype=jnp.float32)
    params = init_params(kp, state_size, action_size)
    prepared = prepare_params(params, state_size, action_size)

    q = dueling_q_forward(x, prepared)
    q = jax.block_until_ready(q)

    q_ref = dueling_q_forward_ref(x, params)
    assert q.shape == (batch, action_size)
    # bf16 weights/activations with f32 accumulation -> small numeric drift vs f32 ref.
    assert jnp.allclose(q, q_ref, atol=3e-2, rtol=3e-2), "mismatch vs reference"

    print("KERNEL_OK")
</pallas_src>

<mosaic_0001>
module attributes {stable_mosaic.version = 11 : i64} {
  func.func @kernel(%arg0: i32, %arg1: memref<128x1152xbf16, #tpu.memory_space<vmem>>, %arg2: memref<1152x128xbf16, #tpu.memory_space<vmem>>, %arg3: memref<3x128x128xbf16, #tpu.memory_space<vmem>>, %arg4: memref<4x128xf32, #tpu.memory_space<vmem>>, %arg5: memref<128x128xf32, #tpu.memory_space<vmem>>) attributes {dimension_semantics = [#tpu.dimension_semantics<parallel>], iteration_bounds = array<i64: 2>, scalar_prefetch = 0 : i64, scratch_operands = 0 : i64, tpu.core_type = #tpu.core_type<tc>, window_params = [{transform_indices = @transform_0, window_bounds = array<i64: 128, 1152>}, {pipeline_mode = #tpu.pipeline_mode<synchronous>, transform_indices = @transform_1, window_bounds = array<i64: 1152, 128>}, {pipeline_mode = #tpu.pipeline_mode<synchronous>, transform_indices = @transform_2, window_bounds = array<i64: 3, 128, 128>}, {pipeline_mode = #tpu.pipeline_mode<synchronous>, transform_indices = @transform_3, window_bounds = array<i64: 4, 128>}, {transform_indices = @transform_4, window_bounds = array<i64: 128, 128>}]} {
    %c0 = arith.constant 0 : index
    %c0_0 = arith.constant 0 : index
    %0 = vector.load %arg1[%c0, %c0_0] : memref<128x1152xbf16, #tpu.memory_space<vmem>>, vector<128x1152xbf16>
    %c0_1 = arith.constant 0 : index
    %c0_2 = arith.constant 0 : index
    %1 = vector.load %arg4[%c0_1, %c0_2] : memref<4x128xf32, #tpu.memory_space<vmem>>, vector<1x128xf32>
    %c1 = arith.constant 1 : index
    %c0_3 = arith.constant 0 : index
    %2 = vector.load %arg4[%c1, %c0_3] : memref<4x128xf32, #tpu.memory_space<vmem>>, vector<1x128xf32>
    %c2 = arith.constant 2 : index
    %c0_4 = arith.constant 0 : index
    %3 = vector.load %arg4[%c2, %c0_4] : memref<4x128xf32, #tpu.memory_space<vmem>>, vector<1x128xf32>
    %c3 = arith.constant 3 : index
    %c0_5 = arith.constant 0 : index
    %4 = vector.load %arg4[%c3, %c0_5] : memref<4x128xf32, #tpu.memory_space<vmem>>, vector<1x128xf32>
    %c0_6 = arith.constant 0 : index
    %c0_7 = arith.constant 0 : index
    %5 = vector.load %arg2[%c0_6, %c0_7] : memref<1152x128xbf16, #tpu.memory_space<vmem>>, vector<1152x128xbf16>
    %cst = arith.constant dense<0.000000e+00> : vector<128x128xf32>
    %6 = tpu.matmul %0, %5, %cst {dimension_numbers = #tpu.dot_dimension_numbers<[1], [0], [0], [1], [0, 0, 1, 1], [], []>} : vector<128x1152xbf16>, vector<1152x128xbf16>, vector<128x128xf32> -> vector<128x128xf32>
    %7 = vector.broadcast %1 : vector<1x128xf32> to vector<128x128xf32>
    %8 = arith.addf %6, %7 : vector<128x128xf32>
    %cst_8 = arith.constant 0.000000e+00 : f32
    %9 = vector.broadcast %cst_8 : f32 to vector<128x128xf32>
    %10 = arith.maximumf %8, %9 : vector<128x128xf32>
    %11 = arith.truncf %10 : vector<128x128xf32> to vector<128x128xbf16>
    %c0_9 = arith.constant 0 : index
    %c0_10 = arith.constant 0 : index
    %c0_11 = arith.constant 0 : index
    %12 = vector.load %arg3[%c0_9, %c0_10, %c0_11] : memref<3x128x128xbf16, #tpu.memory_space<vmem>>, vector<1x128x128xbf16>
    %13 = vector.shape_cast %12 : vector<1x128x128xbf16> to vector<128x128xbf16>
    %cst_12 = arith.constant dense<0.000000e+00> : vector<128x128xf32>
    %14 = tpu.matmul %11, %13, %cst_12 {dimension_numbers = #tpu.dot_dimension_numbers<[1], [0], [0], [1], [0, 0, 1, 1], [], []>} : vector<128x128xbf16>, vector<128x128xbf16>, vector<128x128xf32> -> vector<128x128xf32>
    %15 = vector.broadcast %2 : vector<1x128xf32> to vector<128x128xf32>
    %16 = arith.addf %14, %15 : vector<128x128xf32>
    %cst_13 = arith.constant 0.000000e+00 : f32
    %17 = vector.broadcast %cst_13 : f32 to vector<128x128xf32>
    %18 = arith.maximumf %16, %17 : vector<128x128xf32>
    %19 = arith.truncf %18 : vector<128x128xf32> to vector<128x128xbf16>
    %c1_14 = arith.constant 1 : index
    %c0_15 = arith.constant 0 : index
    %c0_16 = arith.constant 0 : index
    %20 = vector.load %arg3[%c1_14, %c0_15, %c0_16] : memref<3x128x128xbf16, #tpu.memory_space<vmem>>, vector<1x128x128xbf16>
    %21 = vector.shape_cast %20 : vector<1x128x128xbf16> to vector<128x128xbf16>
    %cst_17 = arith.constant dense<0.000000e+00> : vector<128x128xf32>
    %22 = tpu.matmul %19, %21, %cst_17 {dimension_numbers = #tpu.dot_dimension_numbers<[1], [0], [0], [1], [0, 0, 1, 1], [], []>} : vector<128x128xbf16>, vector<128x128xbf16>, vector<128x128xf32> -> vector<128x128xf32>
    %23 = vector.broadcast %3 : vector<1x128xf32> to vector<128x128xf32>
    %24 = arith.addf %22, %23 : vector<128x128xf32>
    %cst_18 = arith.constant 0.000000e+00 : f32
    %25 = vector.broadcast %cst_18 : f32 to vector<128x128xf32>
    %26 = arith.maximumf %24, %25 : vector<128x128xf32>
    %27 = arith.truncf %26 : vector<128x128xf32> to vector<128x128xbf16>
    %c2_19 = arith.constant 2 : index
    %c0_20 = arith.constant 0 : index
    %c0_21 = arith.constant 0 : index
    %28 = vector.load %arg3[%c2_19, %c0_20, %c0_21] : memref<3x128x128xbf16, #tpu.memory_space<vmem>>, vector<1x128x128xbf16>
    %29 = vector.shape_cast %28 : vector<1x128x128xbf16> to vector<128x128xbf16>
    %cst_22 = arith.constant dense<0.000000e+00> : vector<128x128xf32>
    %30 = tpu.matmul %27, %29, %cst_22 {dimension_numbers = #tpu.dot_dimension_numbers<[1], [0], [0], [1], [0, 0, 1, 1], [], []>} : vector<128x128xbf16>, vector<128x128xbf16>, vector<128x128xf32> -> vector<128x128xf32>
    %31 = vector.broadcast %4 : vector<1x128xf32> to vector<128x128xf32>
    %32 = arith.addf %30, %31 : vector<128x128xf32>
    %33 = tpu.iota {dimensions = array<i32: 1>} : vector<128x128xi32>
    %c10_i32 = arith.constant 10 : i32
    %34 = vector.broadcast %c10_i32 : i32 to vector<128x128xi32>
    %35 = arith.cmpi slt, %33, %34 : vector<128x128xi32>
    %cst_23 = arith.constant 0.000000e+00 : f32
    %36 = vector.broadcast %cst_23 : f32 to vector<128x128xf32>
    %37 = arith.select %35, %32, %36 : vector<128x128xi1>, vector<128x128xf32>
    %cst_24 = arith.constant dense<0.000000e+00> : vector<128xf32>
    %38 = vector.multi_reduction <add>, %37, %cst_24 [1] : vector<128x128xf32> to vector<128xf32>
    %39 = vector.shape_cast %38 : vector<128xf32> to vector<128x1xf32>
    %cst_25 = arith.constant 1.000000e-01 : f32
    %40 = vector.broadcast %cst_25 : f32 to vector<128x1xf32>
    %41 = arith.mulf %39, %40 : vector<128x1xf32>
    %c10_i32_26 = arith.constant 10 : i32
    %42 = vector.broadcast %c10_i32_26 : i32 to vector<128x128xi32>
    %43 = arith.cmpi eq, %33, %42 : vector<128x128xi32>
    %cst_27 = arith.constant 0.000000e+00 : f32
    %44 = vector.broadcast %cst_27 : f32 to vector<128x128xf32>
    %45 = arith.select %43, %32, %44 : vector<128x128xi1>, vector<128x128xf32>
    %cst_28 = arith.constant dense<0.000000e+00> : vector<128xf32>
    %46 = vector.multi_reduction <add>, %45, %cst_28 [1] : vector<128x128xf32> to vector<128xf32>
    %47 = vector.shape_cast %46 : vector<128xf32> to vector<128x1xf32>
    %48 = vector.broadcast %47 : vector<128x1xf32> to vector<128x128xf32>
    %49 = arith.addf %32, %48 : vector<128x128xf32>
    %50 = vector.broadcast %41 : vector<128x1xf32> to vector<128x128xf32>
    %51 = arith.subf %49, %50 : vector<128x128xf32>
    %cst_29 = arith.constant 0.000000e+00 : f32
    %52 = vector.broadcast %cst_29 : f32 to vector<128x128xf32>
    %53 = arith.select %35, %51, %52 : vector<128x128xi1>, vector<128x128xf32>
    %c0_30 = arith.constant 0 : index
    %c0_31 = arith.constant 0 : index
    %54 = vector.load %arg5[%c0_30, %c0_31] : memref<128x128xf32, #tpu.memory_space<vmem>>, vector<128x128xf32>
    tpu.vector_store %arg5[%c0_30, %c0_31], %53 {strides = array<i32>} : memref<128x128xf32, #tpu.memory_space<vmem>>, vector<128x128xf32>,
    return
  }
  func.func @transform_0(%arg0: i32) -> (i32, i32) {
    %c0_i32 = arith.constant 0 : i32
    %c0_i32_0 = arith.constant 0 : i32
    return %arg0, %c0_i32 : i32, i32
  }
  func.func @transform_1(%arg0: i32) -> (i32, i32) {
    %c0_i32 = arith.constant 0 : i32
    %c0_i32_0 = arith.constant 0 : i32
    %c0_i32_1 = arith.constant 0 : i32
    return %c0_i32, %c0_i32_0 : i32, i32
  }
  func.func @transform_2(%arg0: i32) -> (i32, i32, i32) {
    %c0_i32 = arith.constant 0 : i32
    %c0_i32_0 = arith.constant 0 : i32
    %c0_i32_1 = arith.constant 0 : i32
    %c0_i32_2 = arith.constant 0 : i32
    return %c0_i32, %c0_i32_0, %c0_i32_1 : i32, i32, i32
  }
  func.func @transform_3(%arg0: i32) -> (i32, i32) {
    %c0_i32 = arith.constant 0 : i32
    %c0_i32_0 = arith.constant 0 : i32
    %c0_i32_1 = arith.constant 0 : i32
    return %c0_i32, %c0_i32_0 : i32, i32
  }
  func.func @transform_4(%arg0: i32) -> (i32, i32) {
    %c0_i32 = arith.constant 0 : i32
    %c0_i32_0 = arith.constant 0 : i32
    return %arg0, %c0_i32 : i32, i32
  }
}

</mosaic_0001>

<llo_original>
// kernel: tpu_custom_call.1
$region0: #{tpu_custom_call.1}
  #allocation0 [shape = 'u32[]', space=smem, size = 0x4, offset = 0x4, fixed_abs, tag = 'smem constant byte address 0x4 - core index']
  #allocation1 [shape = 'u32[72,128]{1,0:T(1,128)}', space=vmem, size = 0x9000, scoped, tag = 'internal scratch']
  %s0 = inlined_call_operand.hbm [shape: bf16[256,1152], index: 0, kind: input, shape index: {}]
  %s1 = inlined_call_operand.hbm [shape: bf16[1152,128], index: 1, kind: input, shape index: {}]
  %s2 = inlined_call_operand.hbm [shape: bf16[3,128,128], index: 2, kind: input, shape index: {}]
  %s3 = inlined_call_operand.hbm [shape: f32[4,128], index: 3, kind: input, shape index: {}]
  %s4 = inlined_call_operand.hbm [shape: f32[256,128], index: 4, kind: output, shape index: {}]
  %s5 = sld [smem:[#allocation0]]
  $region65: #{tpu_custom_call.1} parent=0
    _
  %s7 = ssub.s32 1, %s5
  %s8 = scalar_select 0, %s7, %s5
  $region1: #{tpu_custom_call.1} parent=0
    #allocation2 [shape = 'u8[589824]{0}', space=vmem, size = 0x90000, scoped, tag = 'input window, operand 0']
    #allocation3 [shape = 's32[2]{0}', space=sflag, size = 0x8, scoped, tag = 'scoped memory for tpu_custom_call.1']
    #allocation4 [shape = 's32[2]{0}', space=sflag, size = 0x8, scoped, tag = 'scoped memory for tpu_custom_call.1']
    #allocation5 [shape = 'u8[294912]{0}', space=vmem, size = 0x48000, scoped, tag = 'input window, operand 1, single buffered']
    #allocation6 [shape = 's32[1]{0}', space=sflag, size = 0x4, scoped, tag = 'scoped memory for tpu_custom_call.1']
    #allocation7 [shape = 'u8[98304]{0}', space=vmem, size = 0x18000, scoped, tag = 'input window, operand 2, single buffered']
    #allocation8 [shape = 'u8[2048]{0}', space=vmem, size = 0x800, scoped, tag = 'input window, operand 3, single buffered']
    #allocation9 [shape = 's32[1]{0}', space=sflag, size = 0x4, scoped, tag = 'scoped memory for tpu_custom_call.1']
    #allocation10 [shape = 'u8[131072]{0}', space=vmem, size = 0x20000, scoped, tag = 'output window, operand 0']
    %9 = vsyncpa [#allocation3], 0
    %s10 = scalar_lea.sflag [#allocation3], 1
    %11 = vsyncpa %s10, 0
    %12 = vsyncpa [#allocation6], 0
    %13 = vsyncpa [#allocation9], 0
    %14 = vsyncpa [#allocation4], 0
    %s15 = scalar_lea.sflag [#allocation4], 1
    %16 = vsyncpa %s15, 0
    loop: start=0, step=1, limit=4
    $region2: #{tpu_custom_call.1} parent=1 // loop_pre_header
      _
    $region3: #{tpu_custom_call.1} parent=1 // loop_header
      %s18 = sphi 0, %s22
      %p19 = scmp.ge.s32.totalorder %s18, 4
      %s28 = sphi 0, %s30
      %s31 = sphi 0, %s28
      %s32 = sphi 0, %s31
      %s48 = sphi 0, %s32
      %s52 = sphi 0, %s52
      %s54 = sphi 0, %s52
      %s55 = sphi 0, %s54
      %s69 = sphi 0, %s55
      %s73 = sphi 0, %s73
      %s75 = sphi 0, %s73
      %s76 = sphi 0, %s75
      %s90 = sphi 0, %s76
      %s94 = sphi 0, %s94
      %s96 = sphi 0, %s94
      %s97 = sphi 0, %s96
      %s111 = sphi 0, %s97
      %s117 = sphi 0, %s119
      %s120 = sphi 0, %s117
      %s121 = sphi 0, %s120
      %s137 = sphi 0, %s121
    $region4: #{tpu_custom_call.1} parent=1 // loop_header_branch
      %21 = sbr.rel (%p19) target = $region8
    $region5: #{tpu_custom_call.1} parent=1 // loop_body
      %s23 = ssub.s32 %s18, 1
      %s24 = ssub.s32 %s18, 2
      %s25 = sadd.s32 %s18, 1
      %s26 = ssub.s32 %s18, %s25
      %p27 = scmp.eq.s32.totalorder %s26, 0
      %s29 = sadd.s32 %s28, 1
      %s30 = scalar_select %p27, %s28, %s29
      %p33 = pneg %p27
      %p34 = scmp.eq.s32.totalorder %s18, 1
      %p35 = por %p33, %p34
      %p36 = scmp.ne.s32.totalorder %s28, %s31
      %p37 = scmp.eq.s32.totalorder %s18, 0
      %p38 = por %p36, %p37
      %p39 = scmp.ne.s32.totalorder %s28, %s31
      %p40 = scmp.eq.s32.totalorder %s23, 1
      %p41 = por %p39, %p40
      %p42 = scmp.ne.s32.totalorder %s31, %s32
      %p43 = scmp.eq.s32.totalorder %s23, 0
      %p44 = por %p42, %p43
      %p45 = scmp.ne.s32.totalorder %s31, %s32
      %p46 = scmp.eq.s32.totalorder %s24, 1
      %p47 = por %p45, %p46
      %p49 = scmp.ne.s32.totalorder %s32, %s48
      %p50 = scmp.eq.s32.totalorder %s24, 0
      %p51 = por %p49, %p50
      %s53 = sadd.s32 %s52, 1
      %p56 = scmp.eq.s32.totalorder %s18, 1
      %p57 = scmp.ne.s32.totalorder %s52, %s54
      %p58 = scmp.eq.s32.totalorder %s18, 0
      %p59 = por %p57, %p58
      %p60 = scmp.ne.s32.totalorder %s52, %s54
      %p61 = scmp.eq.s32.totalorder %s23, 1
      %p62 = por %p60, %p61
      %p63 = scmp.ne.s32.totalorder %s54, %s55
      %p64 = scmp.eq.s32.totalorder %s23, 0
      %p65 = por %p63, %p64
      %p66 = scmp.ne.s32.totalorder %s54, %s55
      %p67 = scmp.eq.s32.totalorder %s24, 1
      %p68 = por %p66, %p67
      %p70 = scmp.ne.s32.totalorder %s55, %s69
      %p71 = scmp.eq.s32.totalorder %s24, 0
      %p72 = por %p70, %p71
      %s74 = sadd.s32 %s73, 1
      %p77 = scmp.eq.s32.totalorder %s18, 1
      %p78 = scmp.ne.s32.totalorder %s73, %s75
      %p79 = scmp.eq.s32.totalorder %s18, 0
      %p80 = por %p78, %p79
      %p81 = scmp.ne.s32.totalorder %s73, %s75
      %p82 = scmp.eq.s32.totalorder %s23, 1
      %p83 = por %p81, %p82
      %p84 = scmp.ne.s32.totalorder %s75, %s76
      %p85 = scmp.eq.s32.totalorder %s23, 0
      %p86 = por %p84, %p85
      %p87 = scmp.ne.s32.totalorder %s75, %s76
      %p88 = scmp.eq.s32.totalorder %s24, 1
      %p89 = por %p87, %p88
      %p91 = scmp.ne.s32.totalorder %s76, %s90
      %p92 = scmp.eq.s32.totalorder %s24, 0
      %p93 = por %p91, %p92
      %s95 = sadd.s32 %s94, 1
      %p98 = scmp.eq.s32.totalorder %s18, 1
      %p99 = scmp.ne.s32.totalorder %s94, %s96
      %p100 = scmp.eq.s32.totalorder %s18, 0
      %p101 = por %p99, %p100
      %p102 = scmp.ne.s32.totalorder %s94, %s96
      %p103 = scmp.eq.s32.totalorder %s23, 1
      %p104 = por %p102, %p103
      %p105 = scmp.ne.s32.totalorder %s96, %s97
      %p106 = scmp.eq.s32.totalorder %s23, 0
      %p107 = por %p105, %p106
      %p108 = scmp.ne.s32.totalorder %s96, %s97
      %p109 = scmp.eq.s32.totalorder %s24, 1
      %p110 = por %p108, %p109
      %p112 = scmp.ne.s32.totalorder %s97, %s111
      %p113 = scmp.eq.s32.totalorder %s24, 0
      %p114 = por %p112, %p113
      %s115 = ssub.s32 %s18, %s25
      %p116 = scmp.eq.s32.totalorder %s115, 0
      %s118 = sadd.s32 %s117, 1
      %s119 = scalar_select %p116, %s117, %s118
      %p122 = pneg %p116
      %p123 = scmp.eq.s32.totalorder %s18, 1
      %p124 = por %p122, %p123
      %p125 = scmp.ne.s32.totalorder %s117, %s120
      %p126 = scmp.eq.s32.totalorder %s18, 0
      %p127 = por %p125, %p126
      %p128 = scmp.ne.s32.totalorder %s117, %s120
      %p129 = scmp.eq.s32.totalorder %s23, 1
      %p130 = por %p128, %p129
      %p131 = scmp.ne.s32.totalorder %s120, %s121
      %p132 = scmp.eq.s32.totalorder %s23, 0
      %p133 = por %p131, %p132
      %p134 = scmp.ne.s32.totalorder %s120, %s121
      %p135 = scmp.eq.s32.totalorder %s24, 1
      %p136 = por %p134, %p135
      %p138 = scmp.ne.s32.totalorder %s121, %s137
      %p139 = scmp.eq.s32.totalorder %s24, 0
      %p140 = por %p138, %p139
      %p141 = scmp.le.s32.totalorder 1, %s18
      %p142 = scmp.lt.s32.totalorder %s18, 3
      %p143 = pnand %p141, %p142
      %p144 = pneg %p143
      // Predicated region
      $region9: #{tpu_custom_call.1} parent=5 // pred_check
        _
      $region10: #{tpu_custom_call.1} parent=5 // pred_check_branch
        %146 = sbr.rel (%p143) target = $region12
      $region11: #{tpu_custom_call.1} parent=5 // pred_region
        %s147 = ssub.s32 %s18, 1
        // Predicated region
        $region13: #{tpu_custom_call.1} parent=11 // pred_check
          %p148 = pneg %p65
        $region14: #{tpu_custom_call.1} parent=11 // pred_check_branch
          %150 = sbr.rel (%p148) target = $region16
        $region15: #{tpu_custom_call.1} parent=11 // pred_region
          %152 = vsyncadd [#allocation6], 0
          %s153 = sshll.u32 %s1, 4
          %s154 = int_to_ptr.hbm [resolvable:$true] %s153
          %s155 = sshll.u32 [#allocation5], 4
          %s156 = int_to_ptr.vmem [resolvable:$true] %s155
          %161 = dma.hbm_to_vmem [thread:$0]  %s154, 9216, %s156, [#allocation6], 64, 64, 4
        $region16: #{tpu_custom_call.1} parent=11 // pred_fallthru
          _
        // Predicated region
        $region17: #{tpu_custom_call.1} parent=11 // pred_check
          %p162 = pneg %p86
        $region18: #{tpu_custom_call.1} parent=11 // pred_check_branch
          %164 = sbr.rel (%p162) target = $region20
        $region19: #{tpu_custom_call.1} parent=11 // pred_region
          %166 = vsyncadd [#allocation6], 0
          %s167 = sshll.u32 %s2, 4
          %s168 = int_to_ptr.hbm [resolvable:$true] %s167
          %s169 = sshll.u32 [#allocation7], 4
          %s170 = int_to_ptr.vmem [resolvable:$true] %s169
          %175 = dma.hbm_to_vmem [thread:$0]  %s168, 3072, %s170, [#allocation6], 64, 64, 4
        $region20: #{tpu_custom_call.1} parent=11 // pred_fallthru
          _
        // Predicated region
        $region21: #{tpu_custom_call.1} parent=11 // pred_check
          %p176 = pneg %p107
        $region22: #{tpu_custom_call.1} parent=11 // pred_check_branch
          %178 = sbr.rel (%p176) target = $region24
        $region23: #{tpu_custom_call.1} parent=11 // pred_region
          %180 = vsyncadd [#allocation9], 0
          %s182 = sshll.u32 %s3, 4
          %s183 = int_to_ptr.hbm [resolvable:$true] %s182
          %s184 = sshll.u32 [#allocation8], 4
          %s185 = int_to_ptr.vmem [resolvable:$true] %s184
          %187 = dma.hbm_to_vmem [thread:$0]  %s183, 64, %s185, [#allocation9]
        $region24: #{tpu_custom_call.1} parent=11 // pred_fallthru
          _
      $region12: #{tpu_custom_call.1} parent=5 // pred_fallthru
        _
      %p188 = scmp.lt.s32.totalorder %s18, 2
      // Predicated region
      $region25: #{tpu_custom_call.1} parent=5 // pred_check
        %p189 = pneg %p188
      $region26: #{tpu_custom_call.1} parent=5 // pred_check_branch
        %191 = sbr.rel (%p189) target = $region28
      $region27: #{tpu_custom_call.1} parent=5 // pred_region
        // Predicated region
        $region29: #{tpu_custom_call.1} parent=27 // pred_check
          %p192 = pneg %p38
        $region30: #{tpu_custom_call.1} parent=27 // pred_check_branch
          %194 = sbr.rel (%p192) target = $region32
        $region31: #{tpu_custom_call.1} parent=27 // pred_region
          %s195 = sand.u32 %s28, 1
          %s196 = scalar_lea.sflag [#allocation3], %s195
          %s197 = sand.u32 %s28, 1
          %s198 = smul.addr %s197, 576
          %s199 = scalar_lea.vmem [#allocation2], %s198
          %s200 = smul.u32 16, %s18
          %202 = vsyncadd %s196, 0
          %s203 = smul.addr %s200, 9
          %s204 = smul.addr %s203, 4
          %s205 = scalar_lea.hbm %s0, %s204
          %s206 = sshll.u32 %s205, 4
          %s207 = int_to_ptr.hbm [resolvable:$true] %s206
          %s208 = sshll.u32 %s199, 4
          %s209 = int_to_ptr.vmem [resolvable:$true] %s208
          %214 = dma.hbm_to_vmem [thread:$0]  %s207, 9216, %s209, %s196, 576, 576, 36
        $region32: #{tpu_custom_call.1} parent=27 // pred_fallthru
          _
      $region28: #{tpu_custom_call.1} parent=5 // pred_fallthru
        _
      %p215 = scmp.le.s32.totalorder 1, %s18
      %p216 = scmp.lt.s32.totalorder %s18, 3
      %p217 = pnand %p215, %p216
      %p218 = pneg %p217
      // Predicated region
      $region33: #{tpu_custom_call.1} parent=5 // pred_check
        _
      $region34: #{tpu_custom_call.1} parent=5 // pred_check_branch
        %220 = sbr.rel (%p217) target = $region36
      $region35: #{tpu_custom_call.1} parent=5 // pred_region
        %s221 = ssub.s32 %s18, 1
        %s222 = sand.u32 %s31, 1
        %s223 = scalar_lea.sflag [#allocation3], %s222
        %s224 = sand.u32 %s31, 1
        %s225 = smul.addr %s224, 576
        %s226 = scalar_lea.vmem [#allocation2], %s225
        // Predicated region
        $region37: #{tpu_custom_call.1} parent=35 // pred_check
          %p227 = pneg %p44
        $region38: #{tpu_custom_call.1} parent=35 // pred_check_branch
          %229 = sbr.rel (%p227) target = $region40
        $region39: #{tpu_custom_call.1} parent=35 // pred_region
          %231 = dma.done %s223, 9216
        $region40: #{tpu_custom_call.1} parent=35 // pred_fallthru
          _
        // Predicated region
        $region41: #{tpu_custom_call.1} parent=35 // pred_check
          %p232 = pneg %p65
        $region42: #{tpu_custom_call.1} parent=35 // pred_check_branch
          %234 = sbr.rel (%p232) target = $region44
        $region43: #{tpu_custom_call.1} parent=35 // pred_region
          %236 = dma.done [#allocation6], 9216
        $region44: #{tpu_custom_call.1} parent=35 // pred_fallthru
          _
        // Predicated region
        $region45: #{tpu_custom_call.1} parent=35 // pred_check
          %p237 = pneg %p86
        $region46: #{tpu_custom_call.1} parent=35 // pred_check_branch
          %239 = sbr.rel (%p237) target = $region48
        $region47: #{tpu_custom_call.1} parent=35 // pred_region
          %241 = dma.done [#allocation6], 3072
        $region48: #{tpu_custom_call.1} parent=35 // pred_fallthru
          _
        // Predicated region
        $region49: #{tpu_custom_call.1} parent=35 // pred_check
          %p242 = pneg %p107
        $region50: #{tpu_custom_call.1} parent=35 // pred_check_branch
          %244 = sbr.rel (%p242) target = $region52
        $region51: #{tpu_custom_call.1} parent=35 // pred_region
          %246 = dma.done [#allocation9], 64
        $region52: #{tpu_custom_call.1} parent=35 // pred_fallthru
          _
        %s247 = sand.u32 %s31, 1
        %s248 = scalar_lea.sflag [#allocation3], %s247
        %s249 = sand.u32 %s31, 1
        %s250 = smul.addr %s249, 576
        %s251 = scalar_lea.vmem [#allocation2], %s250
        %p252 = pneg %p44
        %p253 = pneg %p41
        %p254 = pneg %p65
        %p255 = pneg %p62
        %p256 = pneg %p86
        %p257 = pneg %p83
        %p258 = pneg %p107
        %p259 = pneg %p104
        %p260 = pneg %p133
        %p261 = pneg %p130
        %s262 = sand.u32 %s120, 1
        %s263 = scalar_lea.sflag [#allocation4], %s262
        %s264 = sand.u32 %s120, 1
        %s265 = smul.addr %s264, 128
        %s266 = scalar_lea.vmem [#allocation10], %s265
        %s267 = smul.u32 16, %s23
        %s268 = smul.u32 16, %s23
        %v269 = vld [vmem:[%s226] sm:$0xff]
        %v270 = vld [vmem:[%s226 + $0x8] sm:$0xff]
        %v271 = vld [vmem:[%s226 + $0x10] sm:$0xff]
        %v272 = vld [vmem:[%s226 + $0x18] sm:$0xff]
        %v273 = vld [vmem:[%s226 + $0x20] sm:$0xf]
        %v274 = vld [vmem:[%s226 + $0x24] sm:$0xff]
        %v275 = vld [vmem:[%s226 + $0x2c] sm:$0xff]
        %v276 = vld [vmem:[%s226 + $0x34] sm:$0xff]
        %v277 = vld [vmem:[%s226 + $0x3c] sm:$0xff]
        %v278 = vld [vmem:[%s226 + $0x44] sm:$0xf]
        %v279 = vld [vmem:[%s226 + $0x48] sm:$0xff]
        %v280 = vld [vmem:[%s226 + $0x50] sm:$0xff]
        %v281 = vld [vmem:[%s226 + $0x58] sm:$0xff]
        %v282 = vld [vmem:[%s226 + $0x60] sm:$0xff]
        %v283 = vld [vmem:[%s226 + $0x68] sm:$0xf]
        %v284 = vld [vmem:[%s226 + $0x6c] sm:$0xff]
        %v285 = vld [vmem:[%s226 + $0x74] sm:$0xff]
        %v286 = vld [vmem:[%s226 + $0x7c] sm:$0xff]
        %v287 = vld [vmem:[%s226 + $0x84] sm:$0xff]
        %v288 = vld [vmem:[%s226 + $0x8c] sm:$0xf]
        %v289 = vld [vmem:[%s226 + $0x90] sm:$0xff]
        %v290 = vld [vmem:[%s226 + $0x98] sm:$0xff]
        %v291 = vld [vmem:[%s226 + $0xa0] sm:$0xff]
        %v292 = vld [vmem:[%s226 + $0xa8] sm:$0xff]
        %v293 = vld [vmem:[%s226 + $0xb0] sm:$0xf]
        %v294 = vld [vmem:[%s226 + $0xb4] sm:$0xff]
        %v295 = vld [vmem:[%s226 + $0xbc] sm:$0xff]
        %v296 = vld [vmem:[%s226 + $0xc4] sm:$0xff]
        %v297 = vld [vmem:[%s226 + $0xcc] sm:$0xff]
        %v298 = vld [vmem:[%s226 + $0xd4] sm:$0xf]
        %v299 = vld [vmem:[%s226 + $0xd8] sm:$0xff]
        %v300 = vld [vmem:[%s226 + $0xe0] sm:$0xff]
        %v301 = vld [vmem:[%s226 + $0xe8] sm:$0xff]
        %v302 = vld [vmem:[%s226 + $0xf0] sm:$0xff]
        %v303 = vld [vmem:[%s226 + $0xf8] sm:$0xf]
        %v304 = vld [vmem:[%s226 + $0xfc] sm:$0xff]
        %v305 = vld [vmem:[%s226 + $0x104] sm:$0xff]
        %v306 = vld [vmem:[%s226 + $0x10c] sm:$0xff]
        %v307 = vld [vmem:[%s226 + $0x114] sm:$0xff]
        %v308 = vld [vmem:[%s226 + $0x11c] sm:$0xf]
        %v309 = vld [vmem:[%s226 + $0x120] sm:$0xff]
        %v310 = vld [vmem:[%s226 + $0x128] sm:$0xff]
        %v311 = vld [vmem:[%s226 + $0x130] sm:$0xff]
        %v312 = vld [vmem:[%s226 + $0x138] sm:$0xff]
        %v313 = vld [vmem:[%s226 + $0x140] sm:$0xf]
        %v314 = vld [vmem:[%s226 + $0x144] sm:$0xff]
        %v315 = vld [vmem:[%s226 + $0x14c] sm:$0xff]
        %v316 = vld [vmem:[%s226 + $0x154] sm:$0xff]
        %v317 = vld [vmem:[%s226 + $0x15c] sm:$0xff]
        %v318 = vld [vmem:[%s226 + $0x164] sm:$0xf]
        %v319 = vld [vmem:[%s226 + $0x168] sm:$0xff]
        %v320 = vld [vmem:[%s226 + $0x170] sm:$0xff]
        %v321 = vld [vmem:[%s226 + $0x178] sm:$0xff]
        %v322 = vld [vmem:[%s226 + $0x180] sm:$0xff]
        %v323 = vld [vmem:[%s226 + $0x188] sm:$0xf]
        %v324 = vld [vmem:[%s226 + $0x18c] sm:$0xff]
        %v325 = vld [vmem:[%s226 + $0x194] sm:$0xff]
        %v326 = vld [vmem:[%s226 + $0x19c] sm:$0xff]
        %v327 = vld [vmem:[%s226 + $0x1a4] sm:$0xff]
        %v328 = vld [vmem:[%s226 + $0x1ac] sm:$0xf]
        %v329 = vld [vmem:[%s226 + $0x1b0] sm:$0xff]
        %v330 = vld [vmem:[%s226 + $0x1b8] sm:$0xff]
        %v331 = vld [vmem:[%s226 + $0x1c0] sm:$0xff]
        %v332 = vld [vmem:[%s226 + $0x1c8] sm:$0xff]
        %v333 = vld [vmem:[%s226 + $0x1d0] sm:$0xf]
        %v334 = vld [vmem:[%s226 + $0x1d4] sm:$0xff]
        %v335 = vld [vmem:[%s226 + $0x1dc] sm:$0xff]
        %v336 = vld [vmem:[%s226 + $0x1e4] sm:$0xff]
        %v337 = vld [vmem:[%s226 + $0x1ec] sm:$0xff]
        %v338 = vld [vmem:[%s226 + $0x1f4] sm:$0xf]
        %v339 = vld [vmem:[%s226 + $0x1f8] sm:$0xff]
        %v340 = vld [vmem:[%s226 + $0x200] sm:$0xff]
        %v341 = vld [vmem:[%s226 + $0x208] sm:$0xff]
        %v342 = vld [vmem:[%s226 + $0x210] sm:$0xff]
        %v343 = vld [vmem:[%s226 + $0x218] sm:$0xf]
        %v344 = vld [vmem:[%s226 + $0x21c] sm:$0xff]
        %v345 = vld [vmem:[%s226 + $0x224] sm:$0xff]
        %v346 = vld [vmem:[%s226 + $0x22c] sm:$0xff]
        %v347 = vld [vmem:[%s226 + $0x234] sm:$0xff]
        %v348 = vld [vmem:[%s226 + $0x23c] sm:$0xf]
        %v349 = vld [vmem:[#allocation8] sm:$0x1]
        %v350 = vld [vmem:[#allocation8 + $0x1] sm:$0x1]
        %v351 = vld [vmem:[#allocation8 + $0x2] sm:$0x1]
        %v352 = vld [vmem:[#allocation8 + $0x3] sm:$0x1]
        %v353 = vld [vmem:[#allocation5] sm:$0xf]
        %v354 = vld [vmem:[#allocation5 + $0x4] sm:$0xf]
        %v355 = vld [vmem:[#allocation5 + $0x8] sm:$0xf]
        %v356 = vld [vmem:[#allocation5 + $0xc] sm:$0xf]
        %v357 = vld [vmem:[#allocation5 + $0x10] sm:$0xf]
        %v358 = vld [vmem:[#allocation5 + $0x14] sm:$0xf]
        %v359 = vld [vmem:[#allocation5 + $0x18] sm:$0xf]
        %v360 = vld [vmem:[#allocation5 + $0x1c] sm:$0xf]
        %v361 = vld [vmem:[#allocation5 + $0x20] sm:$0xf]
        %v362 = vld [vmem:[#allocation5 + $0x24] sm:$0xf]
        %v363 = vld [vmem:[#allocation5 + $0x28] sm:$0xf]
        %v364 = vld [vmem:[#allocation5 + $0x2c] sm:$0xf]
        %v365 = vld [vmem:[#allocation5 + $0x30] sm:$0xf]
        %v366 = vld [vmem:[#allocation5 + $0x34] sm:$0xf]
        %v367 = vld [vmem:[#allocation5 + $0x38] sm:$0xf]
        %v368 = vld [vmem:[#allocation5 + $0x3c] sm:$0xf]
        %v369 = vld [vmem:[#allocation5 + $0x40] sm:$0xf]
        %v370 = vld [vmem:[#allocation5 + $0x44] sm:$0xf]
        %v371 = vld [vmem:[#allocation5 + $0x48] sm:$0xf]
        %v372 = vld [vmem:[#allocation5 + $0x4c] sm:$0xf]
        %v373 = vld [vmem:[#allocation5 + $0x50] sm:$0xf]
        %v374 = vld [vmem:[#allocation5 + $0x54] sm:$0xf]
        %v375 = vld [vmem:[#allocation5 + $0x58] sm:$0xf]
        %v376 = vld [vmem:[#allocation5 + $0x5c] sm:$0xf]
        %v377 = vld [vmem:[#allocation5 + $0x60] sm:$0xf]
        %v378 = vld [vmem:[#allocation5 + $0x64] sm:$0xf]
        %v379 = vld [vmem:[#allocation5 + $0x68] sm:$0xf]
        %v380 = vld [vmem:[#allocation5 + $0x6c] sm:$0xf]
        %v381 = vld [vmem:[#allocation5 + $0x70] sm:$0xf]
        %v382 = vld [vmem:[#allocation5 + $0x74] sm:$0xf]
        %v383 = vld [vmem:[#allocation5 + $0x78] sm:$0xf]
        %v384 = vld [vmem:[#allocation5 + $0x7c] sm:$0xf]
        %v385 = vld [vmem:[#allocation5 + $0x80] sm:$0xf]
        %v386 = vld [vmem:[#allocation5 + $0x84] sm:$0xf]
        %v387 = vld [vmem:[#allocation5 + $0x88] sm:$0xf]
        %v388 = vld [vmem:[#allocation5 + $0x8c] sm:$0xf]
        %v389 = vld [vmem:[#allocation5 + $0x90] sm:$0xf]
        %v390 = vld [vmem:[#allocation5 + $0x94] sm:$0xf]
        %v391 = vld [vmem:[#allocation5 + $0x98] sm:$0xf]
        %v392 = vld [vmem:[#allocation5 + $0x9c] sm:$0xf]
        %v393 = vld [vmem:[#allocation5 + $0xa0] sm:$0xf]
        %v394 = vld [vmem:[#allocation5 + $0xa4] sm:$0xf]
        %v395 = vld [vmem:[#allocation5 + $0xa8] sm:$0xf]
        %v396 = vld [vmem:[#allocation5 + $0xac] sm:$0xf]
        %v397 = vld [vmem:[#allocation5 + $0xb0] sm:$0xf]
        %v398 = vld [vmem:[#allocation5 + $0xb4] sm:$0xf]
        %v399 = vld [vmem:[#allocation5 + $0xb8] sm:$0xf]
        %v400 = vld [vmem:[#allocation5 + $0xbc] sm:$0xf]
        %v401 = vld [vmem:[#allocation5 + $0xc0] sm:$0xf]
        %v402 = vld [vmem:[#allocation5 + $0xc4] sm:$0xf]
        %v403 = vld [vmem:[#allocation5 + $0xc8] sm:$0xf]
        %v404 = vld [vmem:[#allocation5 + $0xcc] sm:$0xf]
        %v405 = vld [vmem:[#allocation5 + $0xd0] sm:$0xf]
        %v406 = vld [vmem:[#allocation5 + $0xd4] sm:$0xf]
        %v407 = vld [vmem:[#allocation5 + $0xd8] sm:$0xf]
        %v408 = vld [vmem:[#allocation5 + $0xdc] sm:$0xf]
        %v409 = vld [vmem:[#allocation5 + $0xe0] sm:$0xf]
        %v410 = vld [vmem:[#allocation5 + $0xe4] sm:$0xf]
        %v411 = vld [vmem:[#allocation5 + $0xe8] sm:$0xf]
        %v412 = vld [vmem:[#allocation5 + $0xec] sm:$0xf]
        %v413 = vld [vmem:[#allocation5 + $0xf0] sm:$0xf]
        %v414 = vld [vmem:[#allocation5 + $0xf4] sm:$0xf]
        %v415 = vld [vmem:[#allocation5 + $0xf8] sm:$0xf]
        %v416 = vld [vmem:[#allocation5 + $0xfc] sm:$0xf]
        %v417 = vld [vmem:[#allocation5 + $0x100] sm:$0xf]
        %v418 = vld [vmem:[#allocation5 + $0x104] sm:$0xf]
        %v419 = vld [vmem:[#allocation5 + $0x108] sm:$0xf]
        %v420 = vld [vmem:[#allocation5 + $0x10c] sm:$0xf]
        %v421 = vld [vmem:[#allocation5 + $0x110] sm:$0xf]
        %v422 = vld [vmem:[#allocation5 + $0x114] sm:$0xf]
        %v423 = vld [vmem:[#allocation5 + $0x118] sm:$0xf]
        %v424 = vld [vmem:[#allocation5 + $0x11c] sm:$0xf]
        %v425 = vld [vmem:[#allocation5 + $0x120] sm:$0xf]
        %v426 = vld [vmem:[#allocation5 + $0x124] sm:$0xf]
        %v427 = vld [vmem:[#allocation5 + $0x128] sm:$0xf]
        %v428 = vld [vmem:[#allocation5 + $0x12c] sm:$0xf]
        %v429 = vld [vmem:[#allocation5 + $0x130] sm:$0xf]
        %v430 = vld [vmem:[#allocation5 + $0x134] sm:$0xf]
        %v431 = vld [vmem:[#allocation5 + $0x138] sm:$0xf]
        %v432 = vld [vmem:[#allocation5 + $0x13c] sm:$0xf]
        %v433 = vld [vmem:[#allocation5 + $0x140] sm:$0xf]
        %v434 = vld [vmem:[#allocation5 + $0x144] sm:$0xf]
        %v435 = vld [vmem:[#allocation5 + $0x148] sm:$0xf]
        %v436 = vld [vmem:[#allocation5 + $0x14c] sm:$0xf]
        %v437 = vld [vmem:[#allocation5 + $0x150] sm:$0xf]
        %v438 = vld [vmem:[#allocation5 + $0x154] sm:$0xf]
        %v439 = vld [vmem:[#allocation5 + $0x158] sm:$0xf]
        %v440 = vld [vmem:[#allocation5 + $0x15c] sm:$0xf]
        %v441 = vld [vmem:[#allocation5 + $0x160] sm:$0xf]
        %v442 = vld [vmem:[#allocation5 + $0x164] sm:$0xf]
        %v443 = vld [vmem:[#allocation5 + $0x168] sm:$0xf]
        %v444 = vld [vmem:[#allocation5 + $0x16c] sm:$0xf]
        %v445 = vld [vmem:[#allocation5 + $0x170] sm:$0xf]
        %v446 = vld [vmem:[#allocation5 + $0x174] sm:$0xf]
        %v447 = vld [vmem:[#allocation5 + $0x178] sm:$0xf]
        %v448 = vld [vmem:[#allocation5 + $0x17c] sm:$0xf]
        %v449 = vld [vmem:[#allocation5 + $0x180] sm:$0xf]
        %v450 = vld [vmem:[#allocation5 + $0x184] sm:$0xf]
        %v451 = vld [vmem:[#allocation5 + $0x188] sm:$0xf]
        %v452 = vld [vmem:[#allocation5 + $0x18c] sm:$0xf]
        %v453 = vld [vmem:[#allocation5 + $0x190] sm:$0xf]
        %v454 = vld [vmem:[#allocation5 + $0x194] sm:$0xf]
        %v455 = vld [vmem:[#allocation5 + $0x198] sm:$0xf]
        %v456 = vld [vmem:[#allocation5 + $0x19c] sm:$0xf]
        %v457 = vld [vmem:[#allocation5 + $0x1a0] sm:$0xf]
        %v458 = vld [vmem:[#allocation5 + $0x1a4] sm:$0xf]
        %v459 = vld [vmem:[#allocation5 + $0x1a8] sm:$0xf]
        %v460 = vld [vmem:[#allocation5 + $0x1ac] sm:$0xf]
        %v461 = vld [vmem:[#allocation5 + $0x1b0] sm:$0xf]
        %v462 = vld [vmem:[#allocation5 + $0x1b4] sm:$0xf]
        %v463 = vld [vmem:[#allocation5 + $0x1b8] sm:$0xf]
        %v464 = vld [vmem:[#allocation5 + $0x1bc] sm:$0xf]
        %v465 = vld [vmem:[#allocation5 + $0x1c0] sm:$0xf]
        %v466 = vld [vmem:[#allocation5 + $0x1c4] sm:$0xf]
        %v467 = vld [vmem:[#allocation5 + $0x1c8] sm:$0xf]
        %v468 = vld [vmem:[#allocation5 + $0x1cc] sm:$0xf]
        %v469 = vld [vmem:[#allocation5 + $0x1d0] sm:$0xf]
        %v470 = vld [vmem:[#allocation5 + $0x1d4] sm:$0xf]
        %v471 = vld [vmem:[#allocation5 + $0x1d8] sm:$0xf]
        %v472 = vld [vmem:[#allocation5 + $0x1dc] sm:$0xf]
        %v473 = vld [vmem:[#allocation5 + $0x1e0] sm:$0xf]
        %v474 = vld [vmem:[#allocation5 + $0x1e4] sm:$0xf]
        %v475 = vld [vmem:[#allocation5 + $0x1e8] sm:$0xf]
        %v476 = vld [vmem:[#allocation5 + $0x1ec] sm:$0xf]
        %v477 = vld [vmem:[#allocation5 + $0x1f0] sm:$0xf]
        %v478 = vld [vmem:[#allocation5 + $0x1f4] sm:$0xf]
        %v479 = vld [vmem:[#allocation5 + $0x1f8] sm:$0xf]
        %v480 = vld [vmem:[#allocation5 + $0x1fc] sm:$0xf]
        %v481 = vld [vmem:[#allocation5 + $0x200] sm:$0xf]
        %v482 = vld [vmem:[#allocation5 + $0x204] sm:$0xf]
        %v483 = vld [vmem:[#allocation5 + $0x208] sm:$0xf]
        %v484 = vld [vmem:[#allocation5 + $0x20c] sm:$0xf]
        %v485 = vld [vmem:[#allocation5 + $0x210] sm:$0xf]
        %v486 = vld [vmem:[#allocation5 + $0x214] sm:$0xf]
        %v487 = vld [vmem:[#allocation5 + $0x218] sm:$0xf]
        %v488 = vld [vmem:[#allocation5 + $0x21c] sm:$0xf]
        %v489 = vld [vmem:[#allocation5 + $0x220] sm:$0xf]
        %v490 = vld [vmem:[#allocation5 + $0x224] sm:$0xf]
        %v491 = vld [vmem:[#allocation5 + $0x228] sm:$0xf]
        %v492 = vld [vmem:[#allocation5 + $0x22c] sm:$0xf]
        %v493 = vld [vmem:[#allocation5 + $0x230] sm:$0xf]
        %v494 = vld [vmem:[#allocation5 + $0x234] sm:$0xf]
        %v495 = vld [vmem:[#allocation5 + $0x238] sm:$0xf]
        %v496 = vld [vmem:[#allocation5 + $0x23c] sm:$0xf]
        %v497 = vperm.slane %v349, 0
        %v578 = vunpack.c.l.b16 %v269
        %v579 = vunpack.c.h.b16 %v269
        %v580 = vunpack.c.l.b16 %v270
        %v581 = vunpack.c.h.b16 %v270
        %v582 = vunpack.c.l.b16 %v271
        %v583 = vunpack.c.h.b16 %v271
        %v584 = vunpack.c.l.b16 %v272
        %v585 = vunpack.c.h.b16 %v272
        %v586 = vunpack.c.l.b16 %v273
        %v587 = vunpack.c.l.b16 %v274
        %v588 = vunpack.c.h.b16 %v274
        %v589 = vunpack.c.l.b16 %v275
        %v590 = vunpack.c.h.b16 %v275
        %v591 = vunpack.c.l.b16 %v276
        %v592 = vunpack.c.h.b16 %v276
        %v593 = vunpack.c.l.b16 %v277
        %v594 = vunpack.c.h.b16 %v277
        %v595 = vunpack.c.l.b16 %v278
        %v596 = vunpack.c.l.b16 %v279
        %v597 = vunpack.c.h.b16 %v279
        %v598 = vunpack.c.l.b16 %v280
        %v599 = vunpack.c.h.b16 %v280
        %v600 = vunpack.c.l.b16 %v281
        %v601 = vunpack.c.h.b16 %v281
        %v602 = vunpack.c.l.b16 %v282
        %v603 = vunpack.c.h.b16 %v282
        %v604 = vunpack.c.l.b16 %v283
        %v605 = vunpack.c.l.b16 %v284
        %v606 = vunpack.c.h.b16 %v284
        %v607 = vunpack.c.l.b16 %v285
        %v608 = vunpack.c.h.b16 %v285
        %v609 = vunpack.c.l.b16 %v286
        %v610 = vunpack.c.h.b16 %v286
        %v611 = vunpack.c.l.b16 %v287
        %v612 = vunpack.c.h.b16 %v287
        %v613 = vunpack.c.l.b16 %v288
        %v614 = vunpack.c.l.b16 %v289
        %v615 = vunpack.c.h.b16 %v289
        %v616 = vunpack.c.l.b16 %v290
        %v617 = vunpack.c.h.b16 %v290
        %v618 = vunpack.c.l.b16 %v291
        %v619 = vunpack.c.h.b16 %v291
        %v620 = vunpack.c.l.b16 %v292
        %v621 = vunpack.c.h.b16 %v292
        %v622 = vunpack.c.l.b16 %v293
        %v623 = vunpack.c.l.b16 %v294
        %v624 = vunpack.c.h.b16 %v294
        %v625 = vunpack.c.l.b16 %v295
        %v626 = vunpack.c.h.b16 %v295
        %v627 = vunpack.c.l.b16 %v296
        %v628 = vunpack.c.h.b16 %v296
        %v629 = vunpack.c.l.b16 %v297
        %v630 = vunpack.c.h.b16 %v297
        %v631 = vunpack.c.l.b16 %v298
        %v632 = vunpack.c.l.b16 %v299
        %v633 = vunpack.c.h.b16 %v299
        %v634 = vunpack.c.l.b16 %v300
        %v635 = vunpack.c.h.b16 %v300
        %v636 = vunpack.c.l.b16 %v301
        %v637 = vunpack.c.h.b16 %v301
        %v638 = vunpack.c.l.b16 %v302
        %v639 = vunpack.c.h.b16 %v302
        %v640 = vunpack.c.l.b16 %v303
        %v641 = vunpack.c.l.b16 %v304
        %v642 = vunpack.c.h.b16 %v304
        %v643 = vunpack.c.l.b16 %v305
        %v644 = vunpack.c.h.b16 %v305
        %v645 = vunpack.c.l.b16 %v306
        %v646 = vunpack.c.h.b16 %v306
        %v647 = vunpack.c.l.b16 %v307
        %v648 = vunpack.c.h.b16 %v307
        %v649 = vunpack.c.l.b16 %v308
        %v650 = vunpack.c.l.b16 %v309
        %v651 = vunpack.c.h.b16 %v309
        %v652 = vunpack.c.l.b16 %v310
        %v653 = vunpack.c.h.b16 %v310
        %v654 = vunpack.c.l.b16 %v311
        %v655 = vunpack.c.h.b16 %v311
        %v656 = vunpack.c.l.b16 %v312
        %v657 = vunpack.c.h.b16 %v312
        %v658 = vunpack.c.l.b16 %v313
        %v659 = vunpack.c.l.b16 %v314
        %v660 = vunpack.c.h.b16 %v314
        %v661 = vunpack.c.l.b16 %v315
        %v662 = vunpack.c.h.b16 %v315
        %v663 = vunpack.c.l.b16 %v316
        %v664 = vunpack.c.h.b16 %v316
        %v665 = vunpack.c.l.b16 %v317
        %v666 = vunpack.c.h.b16 %v317
        %v667 = vunpack.c.l.b16 %v318
        %v668 = vunpack.c.l.b16 %v319
        %v669 = vunpack.c.h.b16 %v319
        %v670 = vunpack.c.l.b16 %v320
        %v671 = vunpack.c.h.b16 %v320
        %v672 = vunpack.c.l.b16 %v321
        %v673 = vunpack.c.h.b16 %v321
        %v674 = vunpack.c.l.b16 %v322
        %v675 = vunpack.c.h.b16 %v322
        %v676 = vunpack.c.l.b16 %v323
        %v677 = vunpack.c.l.b16 %v324
        %v678 = vunpack.c.h.b16 %v324
        %v679 = vunpack.c.l.b16 %v325
        %v680 = vunpack.c.h.b16 %v325
        %v681 = vunpack.c.l.b16 %v326
        %v682 = vunpack.c.h.b16 %v326
        %v683 = vunpack.c.l.b16 %v327
        %v684 = vunpack.c.h.b16 %v327
        %v685 = vunpack.c.l.b16 %v328
        %v686 = vunpack.c.l.b16 %v329
        %v687 = vunpack.c.h.b16 %v329
        %v688 = vunpack.c.l.b16 %v330
        %v689 = vunpack.c.h.b16 %v330
        %v690 = vunpack.c.l.b16 %v331
        %v691 = vunpack.c.h.b16 %v331
        %v692 = vunpack.c.l.b16 %v332
        %v693 = vunpack.c.h.b16 %v332
        %v694 = vunpack.c.l.b16 %v333
        %v695 = vunpack.c.l.b16 %v334
        %v696 = vunpack.c.h.b16 %v334
        %v697 = vunpack.c.l.b16 %v335
        %v698 = vunpack.c.h.b16 %v335
        %v699 = vunpack.c.l.b16 %v336
        %v700 = vunpack.c.h.b16 %v336
        %v701 = vunpack.c.l.b16 %v337
        %v702 = vunpack.c.h.b16 %v337
        %v703 = vunpack.c.l.b16 %v338
        %v704 = vunpack.c.l.b16 %v339
        %v705 = vunpack.c.h.b16 %v339
        %v706 = vunpack.c.l.b16 %v340
        %v707 = vunpack.c.h.b16 %v340
        %v708 = vunpack.c.l.b16 %v341
        %v709 = vunpack.c.h.b16 %v341
        %v710 = vunpack.c.l.b16 %v342
        %v711 = vunpack.c.h.b16 %v342
        %v712 = vunpack.c.l.b16 %v343
        %v713 = vunpack.c.l.b16 %v344
        %v714 = vunpack.c.h.b16 %v344
        %v715 = vunpack.c.l.b16 %v345
        %v716 = vunpack.c.h.b16 %v345
        %v717 = vunpack.c.l.b16 %v346
        %v718 = vunpack.c.h.b16 %v346
        %v719 = vunpack.c.l.b16 %v347
        %v720 = vunpack.c.h.b16 %v347
        %v721 = vunpack.c.l.b16 %v348
        %v722 = vpack.c.b16 %v587, %v578
        %v723 = vpack.c.b16 %v588, %v579
        %v724 = vpack.c.b16 %v589, %v580
        %v725 = vpack.c.b16 %v590, %v581
        %v726 = vpack.c.b16 %v591, %v582
        %v727 = vpack.c.b16 %v592, %v583
        %v728 = vpack.c.b16 %v593, %v584
        %v729 = vpack.c.b16 %v594, %v585
        %v730 = vpack.c.b16 %v595, %v586
        %v731 = vpack.c.b16 %v605, %v596
        %v732 = vpack.c.b16 %v606, %v597
        %v733 = vpack.c.b16 %v607, %v598
        %v734 = vpack.c.b16 %v608, %v599
        %v735 = vpack.c.b16 %v609, %v600
        %v736 = vpack.c.b16 %v610, %v601
        %v737 = vpack.c.b16 %v611, %v602
        %v738 = vpack.c.b16 %v612, %v603
        %v739 = vpack.c.b16 %v613, %v604
        %v740 = vpack.c.b16 %v623, %v614
        %v741 = vpack.c.b16 %v624, %v615
        %v742 = vpack.c.b16 %v625, %v616
        %v743 = vpack.c.b16 %v626, %v617
        %v744 = vpack.c.b16 %v627, %v618
        %v745 = vpack.c.b16 %v628, %v619
        %v746 = vpack.c.b16 %v629, %v620
        %v747 = vpack.c.b16 %v630, %v621
        %v748 = vpack.c.b16 %v631, %v622
        %v749 = vpack.c.b16 %v641, %v632
        %v750 = vpack.c.b16 %v642, %v633
        %v751 = vpack.c.b16 %v643, %v634
        %v752 = vpack.c.b16 %v644, %v635
        %v753 = vpack.c.b16 %v645, %v636
        %v754 = vpack.c.b16 %v646, %v637
        %v755 = vpack.c.b16 %v647, %v638
        %v756 = vpack.c.b16 %v648, %v639
        %v757 = vpack.c.b16 %v649, %v640
        %v758 = vpack.c.b16 %v659, %v650
        %v759 = vpack.c.b16 %v660, %v651
        %v760 = vpack.c.b16 %v661, %v652
        %v761 = vpack.c.b16 %v662, %v653
        %v762 = vpack.c.b16 %v663, %v654
        %v763 = vpack.c.b16 %v664, %v655
        %v764 = vpack.c.b16 %v665, %v656
        %v765 = vpack.c.b16 %v666, %v657
        %v766 = vpack.c.b16 %v667, %v658
        %v767 = vpack.c.b16 %v677, %v668
        %v768 = vpack.c.b16 %v678, %v669
        %v769 = vpack.c.b16 %v679, %v670
        %v770 = vpack.c.b16 %v680, %v671
        %v771 = vpack.c.b16 %v681, %v672
        %v772 = vpack.c.b16 %v682, %v673
        %v773 = vpack.c.b16 %v683, %v674
        %v774 = vpack.c.b16 %v684, %v675
        %v775 = vpack.c.b16 %v685, %v676
        %v776 = vpack.c.b16 %v695, %v686
        %v777 = vpack.c.b16 %v696, %v687
        %v778 = vpack.c.b16 %v697, %v688
        %v779 = vpack.c.b16 %v698, %v689
        %v780 = vpack.c.b16 %v699, %v690
        %v781 = vpack.c.b16 %v700, %v691
        %v782 = vpack.c.b16 %v701, %v692
        %v783 = vpack.c.b16 %v702, %v693
        %v784 = vpack.c.b16 %v703, %v694
        %v785 = vpack.c.b16 %v713, %v704
        %v786 = vpack.c.b16 %v714, %v705
        %v787 = vpack.c.b16 %v715, %v706
        %v788 = vpack.c.b16 %v716, %v707
        %v789 = vpack.c.b16 %v717, %v708
        %v790 = vpack.c.b16 %v718, %v709
        %v791 = vpack.c.b16 %v719, %v710
        %v792 = vpack.c.b16 %v720, %v711
        %v793 = vpack.c.b16 %v721, %v712
        %v1010 = vunpack.c.l.b16 %v353
        %v1011 = vunpack.c.l.b16 %v354
        %v1012 = vunpack.c.l.b16 %v355
        %v1013 = vunpack.c.l.b16 %v356
        %v1014 = vunpack.c.l.b16 %v357
        %v1015 = vunpack.c.l.b16 %v358
        %v1016 = vunpack.c.l.b16 %v359
        %v1017 = vunpack.c.l.b16 %v360
        %v1018 = vunpack.c.l.b16 %v361
        %v1019 = vunpack.c.l.b16 %v362
        %v1020 = vunpack.c.l.b16 %v363
        %v1021 = vunpack.c.l.b16 %v364
        %v1022 = vunpack.c.l.b16 %v365
        %v1023 = vunpack.c.l.b16 %v366
        %v1024 = vunpack.c.l.b16 %v367
        %v1025 = vunpack.c.l.b16 %v368
        %v1026 = vunpack.c.l.b16 %v369
        %v1027 = vunpack.c.l.b16 %v370
        %v1028 = vunpack.c.l.b16 %v371
        %v1029 = vunpack.c.l.b16 %v372
        %v1030 = vunpack.c.l.b16 %v373
        %v1031 = vunpack.c.l.b16 %v374
        %v1032 = vunpack.c.l.b16 %v375
        %v1033 = vunpack.c.l.b16 %v376
        %v1034 = vunpack.c.l.b16 %v377
        %v1035 = vunpack.c.l.b16 %v378
        %v1036 = vunpack.c.l.b16 %v379
        %v1037 = vunpack.c.l.b16 %v380
        %v1038 = vunpack.c.l.b16 %v381
        %v1039 = vunpack.c.l.b16 %v382
        %v1040 = vunpack.c.l.b16 %v383
        %v1041 = vunpack.c.l.b16 %v384
        %v1042 = vunpack.c.l.b16 %v385
        %v1043 = vunpack.c.l.b16 %v386
        %v1044 = vunpack.c.l.b16 %v387
        %v1045 = vunpack.c.l.b16 %v388
        %v1046 = vunpack.c.l.b16 %v389
        %v1047 = vunpack.c.l.b16 %v390
        %v1048 = vunpack.c.l.b16 %v391
        %v1049 = vunpack.c.l.b16 %v392
        %v1050 = vunpack.c.l.b16 %v393
        %v1051 = vunpack.c.l.b16 %v394
        %v1052 = vunpack.c.l.b16 %v395
        %v1053 = vunpack.c.l.b16 %v396
        %v1054 = vunpack.c.l.b16 %v397
        %v1055 = vunpack.c.l.b16 %v398
        %v1056 = vunpack.c.l.b16 %v399
        %v1057 = vunpack.c.l.b16 %v400
        %v1058 = vunpack.c.l.b16 %v401
        %v1059 = vunpack.c.l.b16 %v402
        %v1060 = vunpack.c.l.b16 %v403
        %v1061 = vunpack.c.l.b16 %v404
        %v1062 = vunpack.c.l.b16 %v405
        %v1063 = vunpack.c.l.b16 %v406
        %v1064 = vunpack.c.l.b16 %v407
        %v1065 = vunpack.c.l.b16 %v408
        %v1066 = vunpack.c.l.b16 %v409
        %v1067 = vunpack.c.l.b16 %v410
        %v1068 = vunpack.c.l.b16 %v411
        %v1069 = vunpack.c.l.b16 %v412
        %v1070 = vunpack.c.l.b16 %v413
        %v1071 = vunpack.c.l.b16 %v414
        %v1072 = vunpack.c.l.b16 %v415
        %v1073 = vunpack.c.l.b16 %v416
        %v1074 = vunpack.c.l.b16 %v417
        %v1075 = vunpack.c.l.b16 %v418
        %v1076 = vunpack.c.l.b16 %v419
        %v1077 = vunpack.c.l.b16 %v420
        %v1078 = vunpack.c.l.b16 %v421
        %v1079 = vunpack.c.l.b16 %v422
        %v1080 = vunpack.c.l.b16 %v423
        %v1081 = vunpack.c.l.b16 %v424
        %v1082 = vunpack.c.l.b16 %v425
        %v1083 = vunpack.c.l.b16 %v426
        %v1084 = vunpack.c.l.b16 %v427
        %v1085 = vunpack.c.l.b16 %v428
        %v1086 = vunpack.c.l.b16 %v429
        %v1087 = vunpack.c.l.b16 %v430
        %v1088 = vunpack.c.l.b16 %v431
        %v1089 = vunpack.c.l.b16 %v432
        %v1090 = vunpack.c.l.b16 %v433
        %v1091 = vunpack.c.l.b16 %v434
        %v1092 = vunpack.c.l.b16 %v435
        %v1093 = vunpack.c.l.b16 %v436
        %v1094 = vunpack.c.l.b16 %v437
        %v1095 = vunpack.c.l.b16 %v438
        %v1096 = vunpack.c.l.b16 %v439
        %v1097 = vunpack.c.l.b16 %v440
        %v1098 = vunpack.c.l.b16 %v441
        %v1099 = vunpack.c.l.b16 %v442
        %v1100 = vunpack.c.l.b16 %v443
        %v1101 = vunpack.c.l.b16 %v444
        %v1102 = vunpack.c.l.b16 %v445
        %v1103 = vunpack.c.l.b16 %v446
        %v1104 = vunpack.c.l.b16 %v447
        %v1105 = vunpack.c.l.b16 %v448
        %v1106 = vunpack.c.l.b16 %v449
        %v1107 = vunpack.c.l.b16 %v450
        %v1108 = vunpack.c.l.b16 %v451
        %v1109 = vunpack.c.l.b16 %v452
        %v1110 = vunpack.c.l.b16 %v453
        %v1111 = vunpack.c.l.b16 %v454
        %v1112 = vunpack.c.l.b16 %v455
        %v1113 = vunpack.c.l.b16 %v456
        %v1114 = vunpack.c.l.b16 %v457
        %v1115 = vunpack.c.l.b16 %v458
        %v1116 = vunpack.c.l.b16 %v459
        %v1117 = vunpack.c.l.b16 %v460
        %v1118 = vunpack.c.l.b16 %v461
        %v1119 = vunpack.c.l.b16 %v462
        %v1120 = vunpack.c.l.b16 %v463
        %v1121 = vunpack.c.l.b16 %v464
        %v1122 = vunpack.c.l.b16 %v465
        %v1123 = vunpack.c.l.b16 %v466
        %v1124 = vunpack.c.l.b16 %v467
        %v1125 = vunpack.c.l.b16 %v468
        %v1126 = vunpack.c.l.b16 %v469
        %v1127 = vunpack.c.l.b16 %v470
        %v1128 = vunpack.c.l.b16 %v471
        %v1129 = vunpack.c.l.b16 %v472
        %v1130 = vunpack.c.l.b16 %v473
        %v1131 = vunpack.c.l.b16 %v474
        %v1132 = vunpack.c.l.b16 %v475
        %v1133 = vunpack.c.l.b16 %v476
        %v1134 = vunpack.c.l.b16 %v477
        %v1135 = vunpack.c.l.b16 %v478
        %v1136 = vunpack.c.l.b16 %v479
        %v1137 = vunpack.c.l.b16 %v480
        %v1138 = vunpack.c.l.b16 %v481
        %v1139 = vunpack.c.l.b16 %v482
        %v1140 = vunpack.c.l.b16 %v483
        %v1141 = vunpack.c.l.b16 %v484
        %v1142 = vunpack.c.l.b16 %v485
        %v1143 = vunpack.c.l.b16 %v486
        %v1144 = vunpack.c.l.b16 %v487
        %v1145 = vunpack.c.l.b16 %v488
        %v1146 = vunpack.c.l.b16 %v489
        %v1147 = vunpack.c.l.b16 %v490
        %v1148 = vunpack.c.l.b16 %v491
        %v1149 = vunpack.c.l.b16 %v492
        %v1150 = vunpack.c.l.b16 %v493
        %v1151 = vunpack.c.l.b16 %v494
        %v1152 = vunpack.c.l.b16 %v495
        %v1153 = vunpack.c.l.b16 %v496
        %v1154 = vpack.c.b16 %v1011, %v1010
        %v1155 = vpack.c.b16 %v1013, %v1012
        %v1156 = vpack.c.b16 %v1015, %v1014
        %v1157 = vpack.c.b16 %v1017, %v1016
        %v1158 = vpack.c.b16 %v1019, %v1018
        %v1159 = vpack.c.b16 %v1021, %v1020
        %v1160 = vpack.c.b16 %v1023, %v1022
        %v1161 = vpack.c.b16 %v1025, %v1024
        %v1162 = vpack.c.b16 %v1027, %v1026
        %v1163 = vpack.c.b16 %v1029, %v1028
        %v1164 = vpack.c.b16 %v1031, %v1030
        %v1165 = vpack.c.b16 %v1033, %v1032
        %v1166 = vpack.c.b16 %v1035, %v1034
        %v1167 = vpack.c.b16 %v1037, %v1036
        %v1168 = vpack.c.b16 %v1039, %v1038
        %v1169 = vpack.c.b16 %v1041, %v1040
        %v1170 = vpack.c.b16 %v1043, %v1042
        %v1171 = vpack.c.b16 %v1045, %v1044
        %v1172 = vpack.c.b16 %v1047, %v1046
        %v1173 = vpack.c.b16 %v1049, %v1048
        %v1174 = vpack.c.b16 %v1051, %v1050
        %v1175 = vpack.c.b16 %v1053, %v1052
        %v1176 = vpack.c.b16 %v1055, %v1054
        %v1177 = vpack.c.b16 %v1057, %v1056
        %v1178 = vpack.c.b16 %v1059, %v1058
        %v1179 = vpack.c.b16 %v1061, %v1060
        %v1180 = vpack.c.b16 %v1063, %v1062
        %v1181 = vpack.c.b16 %v1065, %v1064
        %v1182 = vpack.c.b16 %v1067, %v1066
        %v1183 = vpack.c.b16 %v1069, %v1068
        %v1184 = vpack.c.b16 %v1071, %v1070
        %v1185 = vpack.c.b16 %v1073, %v1072
        %v1186 = vpack.c.b16 %v1075, %v1074
        %v1187 = vpack.c.b16 %v1077, %v1076
        %v1188 = vpack.c.b16 %v1079, %v1078
        %v1189 = vpack.c.b16 %v1081, %v1080
        %v1190 = vpack.c.b16 %v1083, %v1082
        %v1191 = vpack.c.b16 %v1085, %v1084
        %v1192 = vpack.c.b16 %v1087, %v1086
        %v1193 = vpack.c.b16 %v1089, %v1088
        %v1194 = vpack.c.b16 %v1091, %v1090
        %v1195 = vpack.c.b16 %v1093, %v1092
        %v1196 = vpack.c.b16 %v1095, %v1094
        %v1197 = vpack.c.b16 %v1097, %v1096
        %v1198 = vpack.c.b16 %v1099, %v1098
        %v1199 = vpack.c.b16 %v1101, %v1100
        %v1200 = vpack.c.b16 %v1103, %v1102
        %v1201 = vpack.c.b16 %v1105, %v1104
        %v1202 = vpack.c.b16 %v1107, %v1106
        %v1203 = vpack.c.b16 %v1109, %v1108
        %v1204 = vpack.c.b16 %v1111, %v1110
        %v1205 = vpack.c.b16 %v1113, %v1112
        %v1206 = vpack.c.b16 %v1115, %v1114
        %v1207 = vpack.c.b16 %v1117, %v1116
        %v1208 = vpack.c.b16 %v1119, %v1118
        %v1209 = vpack.c.b16 %v1121, %v1120
        %v1210 = vpack.c.b16 %v1123, %v1122
        %v1211 = vpack.c.b16 %v1125, %v1124
        %v1212 = vpack.c.b16 %v1127, %v1126
        %v1213 = vpack.c.b16 %v1129, %v1128
        %v1214 = vpack.c.b16 %v1131, %v1130
        %v1215 = vpack.c.b16 %v1133, %v1132
        %v1216 = vpack.c.b16 %v1135, %v1134
        %v1217 = vpack.c.b16 %v1137, %v1136
        %v1218 = vpack.c.b16 %v1139, %v1138
        %v1219 = vpack.c.b16 %v1141, %v1140
        %v1220 = vpack.c.b16 %v1143, %v1142
        %v1221 = vpack.c.b16 %v1145, %v1144
        %v1222 = vpack.c.b16 %v1147, %v1146
        %v1223 = vpack.c.b16 %v1149, %v1148
        %v1224 = vpack.c.b16 %v1151, %v1150
        %v1225 = vpack.c.b16 %v1153, %v1152
        %1298 = vmatpush.bf16.msra.mxu0 %v1161
        %1299 = vmatpush.bf16.msra.mxu0 %v1160
        %1300 = vmatpush.bf16.msra.mxu0 %v1159
        %1301 = vmatpush.bf16.msra.mxu0 %v1158
        %1302 = vmatpush.bf16.msra.mxu0 %v1157
        %1303 = vmatpush.bf16.msra.mxu0 %v1156
        %1304 = vmatpush.bf16.msra.mxu0 %v1155
        %1305 = vmatpush.bf16.msra.mxu0 %v1154
        %1306 = vmatmul.bf16.gmra.mxu0 %v722
        %v1307 = vpop.f32.mrf.mxu0
        %v1308 = vadd.f32 %v497, %v1307
        %v1309 = vpop.f32.mrf.mxu0
        %v1310 = vadd.f32 %v497, %v1309
        %1311 = vmatmul.bf16.gmra.mxu0 %v731
        %v1312 = vpop.f32.mrf.mxu0
        %v1313 = vadd.f32 %v497, %v1312
        %v1314 = vpop.f32.mrf.mxu0
        %v1315 = vadd.f32 %v497, %v1314
        %1316 = vmatmul.bf16.gmra.mxu0 %v740
        %v1317 = vpop.f32.mrf.mxu0
        %v1318 = vadd.f32 %v497, %v1317
        %v1319 = vpop.f32.mrf.mxu0
        %v1320 = vadd.f32 %v497, %v1319
        %1321 = vmatmul.bf16.gmra.mxu0 %v749
        %v1322 = vpop.f32.mrf.mxu0
        %v1323 = vadd.f32 %v497, %v1322
        %v1324 = vpop.f32.mrf.mxu0
        %v1325 = vadd.f32 %v497, %v1324
        %1326 = vmatmul.bf16.gmra.mxu0 %v758
        %v1327 = vpop.f32.mrf.mxu0
        %v1328 = vadd.f32 %v497, %v1327
        %v1329 = vpop.f32.mrf.mxu0
        %v1330 = vadd.f32 %v497, %v1329
        %1331 = vmatmul.bf16.gmra.mxu0 %v767
        %v1332 = vpop.f32.mrf.mxu0
        %v1333 = vadd.f32 %v497, %v1332
        %v1334 = vpop.f32.mrf.mxu0
        %v1335 = vadd.f32 %v497, %v1334
        %1336 = vmatmul.bf16.gmra.mxu0 %v776
        %v1337 = vpop.f32.mrf.mxu0
        %v1338 = vadd.f32 %v497, %v1337
        %v1339 = vpop.f32.mrf.mxu0
        %v1340 = vadd.f32 %v497, %v1339
        %1341 = vmatmul.bf16.gmra.mxu0 %v785
        %v1342 = vpop.f32.mrf.mxu0
        %v1343 = vadd.f32 %v497, %v1342
        %v1344 = vpop.f32.mrf.mxu0
        %v1345 = vadd.f32 %v497, %v1344
        %1346 = vdwg.mxu0
        %1347 = vmatpush.bf16.msra.mxu0 %v1169
        %1348 = vmatpush.bf16.msra.mxu0 %v1168
        %1349 = vmatpush.bf16.msra.mxu0 %v1167
        %1350 = vmatpush.bf16.msra.mxu0 %v1166
        %1351 = vmatpush.bf16.msra.mxu0 %v1165
        %1352 = vmatpush.bf16.msra.mxu0 %v1164
        %1353 = vmatpush.bf16.msra.mxu0 %v1163
        %1354 = vmatpush.bf16.msra.mxu0 %v1162
        %1355 = vmatmul.bf16.gmra.mxu0 %v723
        %v1356 = vpop.f32.mrf.mxu0
        %v1357 = vadd.f32 %v1308, %v1356
        %v1358 = vpop.f32.mrf.mxu0
        %v1359 = vadd.f32 %v1310, %v1358
        %1360 = vmatmul.bf16.gmra.mxu0 %v732
        %v1361 = vpop.f32.mrf.mxu0
        %v1362 = vadd.f32 %v1313, %v1361
        %v1363 = vpop.f32.mrf.mxu0
        %v1364 = vadd.f32 %v1315, %v1363
        %1365 = vmatmul.bf16.gmra.mxu0 %v741
        %v1366 = vpop.f32.mrf.mxu0
        %v1367 = vadd.f32 %v1318, %v1366
        %v1368 = vpop.f32.mrf.mxu0
        %v1369 = vadd.f32 %v1320, %v1368
        %1370 = vmatmul.bf16.gmra.mxu0 %v750
        %v1371 = vpop.f32.mrf.mxu0
        %v1372 = vadd.f32 %v1323, %v1371
        %v1373 = vpop.f32.mrf.mxu0
        %v1374 = vadd.f32 %v1325, %v1373
        %1375 = vmatmul.bf16.gmra.mxu0 %v759
        %v1376 = vpop.f32.mrf.mxu0
        %v1377 = vadd.f32 %v1328, %v1376
        %v1378 = vpop.f32.mrf.mxu0
        %v1379 = vadd.f32 %v1330, %v1378
        %1380 = vmatmul.bf16.gmra.mxu0 %v768
        %v1381 = vpop.f32.mrf.mxu0
        %v1382 = vadd.f32 %v1333, %v1381
        %v1383 = vpop.f32.mrf.mxu0
        %v1384 = vadd.f32 %v1335, %v1383
        %1385 = vmatmul.bf16.gmra.mxu0 %v777
        %v1386 = vpop.f32.mrf.mxu0
        %v1387 = vadd.f32 %v1338, %v1386
        %v1388 = vpop.f32.mrf.mxu0
        %v1389 = vadd.f32 %v1340, %v1388
        %1390 = vmatmul.bf16.gmra.mxu0 %v786
        %v1391 = vpop.f32.mrf.mxu0
        %v1392 = vadd.f32 %v1343, %v1391
        %v1393 = vpop.f32.mrf.mxu0
        %v1394 = vadd.f32 %v1345, %v1393
        %1395 = vdwg.mxu0
        %1396 = vmatpush.bf16.msra.mxu0 %v1177
        %1397 = vmatpush.bf16.msra.mxu0 %v1176
        %1398 = vmatpush.bf16.msra.mxu0 %v1175
        %1399 = vmatpush.bf16.msra.mxu0 %v1174
        %1400 = vmatpush.bf16.msra.mxu0 %v1173
        %1401 = vmatpush.bf16.msra.mxu0 %v1172
        %1402 = vmatpush.bf16.msra.mxu0 %v1171
        %1403 = vmatpush.bf16.msra.mxu0 %v1170
        %1404 = vmatmul.bf16.gmra.mxu0 %v724
        %v1405 = vpop.f32.mrf.mxu0
        %v1406 = vadd.f32 %v1357, %v1405
        %v1407 = vpop.f32.mrf.mxu0
        %v1408 = vadd.f32 %v1359, %v1407
        %1409 = vmatmul.bf16.gmra.mxu0 %v733
        %v1410 = vpop.f32.mrf.mxu0
        %v1411 = vadd.f32 %v1362, %v1410
        %v1412 = vpop.f32.mrf.mxu0
        %v1413 = vadd.f32 %v1364, %v1412
        %1414 = vmatmul.bf16.gmra.mxu0 %v742
        %v1415 = vpop.f32.mrf.mxu0
        %v1416 = vadd.f32 %v1367, %v1415
        %v1417 = vpop.f32.mrf.mxu0
        %v1418 = vadd.f32 %v1369, %v1417
        %1419 = vmatmul.bf16.gmra.mxu0 %v751
        %v1420 = vpop.f32.mrf.mxu0
        %v1421 = vadd.f32 %v1372, %v1420
        %v1422 = vpop.f32.mrf.mxu0
        %v1423 = vadd.f32 %v1374, %v1422
        %1424 = vmatmul.bf16.gmra.mxu0 %v760
        %v1425 = vpop.f32.mrf.mxu0
        %v1426 = vadd.f32 %v1377, %v1425
        %v1427 = vpop.f32.mrf.mxu0
        %v1428 = vadd.f32 %v1379, %v1427
        %1429 = vmatmul.bf16.gmra.mxu0 %v769
        %v1430 = vpop.f32.mrf.mxu0
        %v1431 = vadd.f32 %v1382, %v1430
        %v1432 = vpop.f32.mrf.mxu0
        %v1433 = vadd.f32 %v1384, %v1432
        %1434 = vmatmul.bf16.gmra.mxu0 %v778
        %v1435 = vpop.f32.mrf.mxu0
        %v1436 = vadd.f32 %v1387, %v1435
        %v1437 = vpop.f32.mrf.mxu0
        %v1438 = vadd.f32 %v1389, %v1437
        %1439 = vmatmul.bf16.gmra.mxu0 %v787
        %v1440 = vpop.f32.mrf.mxu0
        %v1441 = vadd.f32 %v1392, %v1440
        %v1442 = vpop.f32.mrf.mxu0
        %v1443 = vadd.f32 %v1394, %v1442
        %1444 = vdwg.mxu0
        %1445 = vmatpush.bf16.msra.mxu0 %v1185
        %1446 = vmatpush.bf16.msra.mxu0 %v1184
        %1447 = vmatpush.bf16.msra.mxu0 %v1183
        %1448 = vmatpush.bf16.msra.mxu0 %v1182
        %1449 = vmatpush.bf16.msra.mxu0 %v1181
        %1450 = vmatpush.bf16.msra.mxu0 %v1180
        %1451 = vmatpush.bf16.msra.mxu0 %v1179
        %1452 = vmatpush.bf16.msra.mxu0 %v1178
        %1453 = vmatmul.bf16.gmra.mxu0 %v725
        %v1454 = vpop.f32.mrf.mxu0
        %v1455 = vadd.f32 %v1406, %v1454
        %v1456 = vpop.f32.mrf.mxu0
        %v1457 = vadd.f32 %v1408, %v1456
        %1458 = vmatmul.bf16.gmra.mxu0 %v734
        %v1459 = vpop.f32.mrf.mxu0
        %v1460 = vadd.f32 %v1411, %v1459
        %v1461 = vpop.f32.mrf.mxu0
        %v1462 = vadd.f32 %v1413, %v1461
        %1463 = vmatmul.bf16.gmra.mxu0 %v743
        %v1464 = vpop.f32.mrf.mxu0
        %v1465 = vadd.f32 %v1416, %v1464
        %v1466 = vpop.f32.mrf.mxu0
        %v1467 = vadd.f32 %v1418, %v1466
        %1468 = vmatmul.bf16.gmra.mxu0 %v752
        %v1469 = vpop.f32.mrf.mxu0
        %v1470 = vadd.f32 %v1421, %v1469
        %v1471 = vpop.f32.mrf.mxu0
        %v1472 = vadd.f32 %v1423, %v1471
        %1473 = vmatmul.bf16.gmra.mxu0 %v761
        %v1474 = vpop.f32.mrf.mxu0
        %v1475 = vadd.f32 %v1426, %v1474
        %v1476 = vpop.f32.mrf.mxu0
        %v1477 = vadd.f32 %v1428, %v1476
        %1478 = vmatmul.bf16.gmra.mxu0 %v770
        %v1479 = vpop.f32.mrf.mxu0
        %v1480 = vadd.f32 %v1431, %v1479
        %v1481 = vpop.f32.mrf.mxu0
        %v1482 = vadd.f32 %v1433, %v1481
        %1483 = vmatmul.bf16.gmra.mxu0 %v779
        %v1484 = vpop.f32.mrf.mxu0
        %v1485 = vadd.f32 %v1436, %v1484
        %v1486 = vpop.f32.mrf.mxu0
        %v1487 = vadd.f32 %v1438, %v1486
        %1488 = vmatmul.bf16.gmra.mxu0 %v788
        %v1489 = vpop.f32.mrf.mxu0
        %v1490 = vadd.f32 %v1441, %v1489
        %v1491 = vpop.f32.mrf.mxu0
        %v1492 = vadd.f32 %v1443, %v1491
        %1493 = vdwg.mxu0
        %1494 = vmatpush.bf16.msra.mxu0 %v1193
        %1495 = vmatpush.bf16.msra.mxu0 %v1192
        %1496 = vmatpush.bf16.msra.mxu0 %v1191
        %1497 = vmatpush.bf16.msra.mxu0 %v1190
        %1498 = vmatpush.bf16.msra.mxu0 %v1189
        %1499 = vmatpush.bf16.msra.mxu0 %v1188
        %1500 = vmatpush.bf16.msra.mxu0 %v1187
        %1501 = vmatpush.bf16.msra.mxu0 %v1186
        %1502 = vmatmul.bf16.gmra.mxu0 %v726
        %v1503 = vpop.f32.mrf.mxu0
        %v1504 = vadd.f32 %v1455, %v1503
        %v1505 = vpop.f32.mrf.mxu0
        %v1506 = vadd.f32 %v1457, %v1505
        %1507 = vmatmul.bf16.gmra.mxu0 %v735
        %v1508 = vpop.f32.mrf.mxu0
        %v1509 = vadd.f32 %v1460, %v1508
        %v1510 = vpop.f32.mrf.mxu0
        %v1511 = vadd.f32 %v1462, %v1510
        %1512 = vmatmul.bf16.gmra.mxu0 %v744
        %v1513 = vpop.f32.mrf.mxu0
        %v1514 = vadd.f32 %v1465, %v1513
        %v1515 = vpop.f32.mrf.mxu0
        %v1516 = vadd.f32 %v1467, %v1515
        %1517 = vmatmul.bf16.gmra.mxu0 %v753
        %v1518 = vpop.f32.mrf.mxu0
        %v1519 = vadd.f32 %v1470, %v1518
        %v1520 = vpop.f32.mrf.mxu0
        %v1521 = vadd.f32 %v1472, %v1520
        %1522 = vmatmul.bf16.gmra.mxu0 %v762
        %v1523 = vpop.f32.mrf.mxu0
        %v1524 = vadd.f32 %v1475, %v1523
        %v1525 = vpop.f32.mrf.mxu0
        %v1526 = vadd.f32 %v1477, %v1525
        %1527 = vmatmul.bf16.gmra.mxu0 %v771
        %v1528 = vpop.f32.mrf.mxu0
        %v1529 = vadd.f32 %v1480, %v1528
        %v1530 = vpop.f32.mrf.mxu0
        %v1531 = vadd.f32 %v1482, %v1530
        %1532 = vmatmul.bf16.gmra.mxu0 %v780
        %v1533 = vpop.f32.mrf.mxu0
        %v1534 = vadd.f32 %v1485, %v1533
        %v1535 = vpop.f32.mrf.mxu0
        %v1536 = vadd.f32 %v1487, %v1535
        %1537 = vmatmul.bf16.gmra.mxu0 %v789
        %v1538 = vpop.f32.mrf.mxu0
        %v1539 = vadd.f32 %v1490, %v1538
        %v1540 = vpop.f32.mrf.mxu0
        %v1541 = vadd.f32 %v1492, %v1540
        %1542 = vdwg.mxu0
        %1543 = vmatpush.bf16.msra.mxu0 %v1201
        %1544 = vmatpush.bf16.msra.mxu0 %v1200
        %1545 = vmatpush.bf16.msra.mxu0 %v1199
        %1546 = vmatpush.bf16.msra.mxu0 %v1198
        %1547 = vmatpush.bf16.msra.mxu0 %v1197
        %1548 = vmatpush.bf16.msra.mxu0 %v1196
        %1549 = vmatpush.bf16.msra.mxu0 %v1195
        %1550 = vmatpush.bf16.msra.mxu0 %v1194
        %1551 = vmatmul.bf16.gmra.mxu0 %v727
        %v1552 = vpop.f32.mrf.mxu0
        %v1553 = vadd.f32 %v1504, %v1552
        %v1554 = vpop.f32.mrf.mxu0
        %v1555 = vadd.f32 %v1506, %v1554
        %1556 = vmatmul.bf16.gmra.mxu0 %v736
        %v1557 = vpop.f32.mrf.mxu0
        %v1558 = vadd.f32 %v1509, %v1557
        %v1559 = vpop.f32.mrf.mxu0
        %v1560 = vadd.f32 %v1511, %v1559
        %1561 = vmatmul.bf16.gmra.mxu0 %v745
        %v1562 = vpop.f32.mrf.mxu0
        %v1563 = vadd.f32 %v1514, %v1562
        %v1564 = vpop.f32.mrf.mxu0
        %v1565 = vadd.f32 %v1516, %v1564
        %1566 = vmatmul.bf16.gmra.mxu0 %v754
        %v1567 = vpop.f32.mrf.mxu0
        %v1568 = vadd.f32 %v1519, %v1567
        %v1569 = vpop.f32.mrf.mxu0
        %v1570 = vadd.f32 %v1521, %v1569
        %1571 = vmatmul.bf16.gmra.mxu0 %v763
        %v1572 = vpop.f32.mrf.mxu0
        %v1573 = vadd.f32 %v1524, %v1572
        %v1574 = vpop.f32.mrf.mxu0
        %v1575 = vadd.f32 %v1526, %v1574
        %1576 = vmatmul.bf16.gmra.mxu0 %v772
        %v1577 = vpop.f32.mrf.mxu0
        %v1578 = vadd.f32 %v1529, %v1577
        %v1579 = vpop.f32.mrf.mxu0
        %v1580 = vadd.f32 %v1531, %v1579
        %1581 = vmatmul.bf16.gmra.mxu0 %v781
        %v1582 = vpop.f32.mrf.mxu0
        %v1583 = vadd.f32 %v1534, %v1582
        %v1584 = vpop.f32.mrf.mxu0
        %v1585 = vadd.f32 %v1536, %v1584
        %1586 = vmatmul.bf16.gmra.mxu0 %v790
        %v1587 = vpop.f32.mrf.mxu0
        %v1588 = vadd.f32 %v1539, %v1587
        %v1589 = vpop.f32.mrf.mxu0
        %v1590 = vadd.f32 %v1541, %v1589
        %1591 = vdwg.mxu0
        %1592 = vmatpush.bf16.msra.mxu0 %v1209
        %1593 = vmatpush.bf16.msra.mxu0 %v1208
        %1594 = vmatpush.bf16.msra.mxu0 %v1207
        %1595 = vmatpush.bf16.msra.mxu0 %v1206
        %1596 = vmatpush.bf16.msra.mxu0 %v1205
        %1597 = vmatpush.bf16.msra.mxu0 %v1204
        %1598 = vmatpush.bf16.msra.mxu0 %v1203
        %1599 = vmatpush.bf16.msra.mxu0 %v1202
        %1600 = vmatmul.bf16.gmra.mxu0 %v728
        %v1601 = vpop.f32.mrf.mxu0
        %v1602 = vadd.f32 %v1553, %v1601
        %v1603 = vpop.f32.mrf.mxu0
        %v1604 = vadd.f32 %v1555, %v1603
        %1605 = vmatmul.bf16.gmra.mxu0 %v737
        %v1606 = vpop.f32.mrf.mxu0
        %v1607 = vadd.f32 %v1558, %v1606
        %v1608 = vpop.f32.mrf.mxu0
        %v1609 = vadd.f32 %v1560, %v1608
        %1610 = vmatmul.bf16.gmra.mxu0 %v746
        %v1611 = vpop.f32.mrf.mxu0
        %v1612 = vadd.f32 %v1563, %v1611
        %v1613 = vpop.f32.mrf.mxu0
        %v1614 = vadd.f32 %v1565, %v1613
        %1615 = vmatmul.bf16.gmra.mxu0 %v755
        %v1616 = vpop.f32.mrf.mxu0
        %v1617 = vadd.f32 %v1568, %v1616
        %v1618 = vpop.f32.mrf.mxu0
        %v1619 = vadd.f32 %v1570, %v1618
        %1620 = vmatmul.bf16.gmra.mxu0 %v764
        %v1621 = vpop.f32.mrf.mxu0
        %v1622 = vadd.f32 %v1573, %v1621
        %v1623 = vpop.f32.mrf.mxu0
        %v1624 = vadd.f32 %v1575, %v1623
        %1625 = vmatmul.bf16.gmra.mxu0 %v773
        %v1626 = vpop.f32.mrf.mxu0
        %v1627 = vadd.f32 %v1578, %v1626
        %v1628 = vpop.f32.mrf.mxu0
        %v1629 = vadd.f32 %v1580, %v1628
        %1630 = vmatmul.bf16.gmra.mxu0 %v782
        %v1631 = vpop.f32.mrf.mxu0
        %v1632 = vadd.f32 %v1583, %v1631
        %v1633 = vpop.f32.mrf.mxu0
        %v1634 = vadd.f32 %v1585, %v1633
        %1635 = vmatmul.bf16.gmra.mxu0 %v791
        %v1636 = vpop.f32.mrf.mxu0
        %v1637 = vadd.f32 %v1588, %v1636
        %v1638 = vpop.f32.mrf.mxu0
        %v1639 = vadd.f32 %v1590, %v1638
        %1640 = vdwg.mxu0
        %1641 = vmatpush.bf16.msra.mxu0 %v1217
        %1642 = vmatpush.bf16.msra.mxu0 %v1216
        %1643 = vmatpush.bf16.msra.mxu0 %v1215
        %1644 = vmatpush.bf16.msra.mxu0 %v1214
        %1645 = vmatpush.bf16.msra.mxu0 %v1213
        %1646 = vmatpush.bf16.msra.mxu0 %v1212
        %1647 = vmatpush.bf16.msra.mxu0 %v1211
        %1648 = vmatpush.bf16.msra.mxu0 %v1210
        %1649 = vmatmul.bf16.gmra.mxu0 %v729
        %v1650 = vpop.f32.mrf.mxu0
        %v1651 = vadd.f32 %v1602, %v1650
        %v1652 = vpop.f32.mrf.mxu0
        %v1653 = vadd.f32 %v1604, %v1652
        %1654 = vmatmul.bf16.gmra.mxu0 %v738
        %v1655 = vpop.f32.mrf.mxu0
        %v1656 = vadd.f32 %v1607, %v1655
        %v1657 = vpop.f32.mrf.mxu0
        %v1658 = vadd.f32 %v1609, %v1657
        %1659 = vmatmul.bf16.gmra.mxu0 %v747
        %v1660 = vpop.f32.mrf.mxu0
        %v1661 = vadd.f32 %v1612, %v1660
        %v1662 = vpop.f32.mrf.mxu0
        %v1663 = vadd.f32 %v1614, %v1662
        %1664 = vmatmul.bf16.gmra.mxu0 %v756
        %v1665 = vpop.f32.mrf.mxu0
        %v1666 = vadd.f32 %v1617, %v1665
        %v1667 = vpop.f32.mrf.mxu0
        %v1668 = vadd.f32 %v1619, %v1667
        %1669 = vmatmul.bf16.gmra.mxu0 %v765
        %v1670 = vpop.f32.mrf.mxu0
        %v1671 = vadd.f32 %v1622, %v1670
        %v1672 = vpop.f32.mrf.mxu0
        %v1673 = vadd.f32 %v1624, %v1672
        %1674 = vmatmul.bf16.gmra.mxu0 %v774
        %v1675 = vpop.f32.mrf.mxu0
        %v1676 = vadd.f32 %v1627, %v1675
        %v1677 = vpop.f32.mrf.mxu0
        %v1678 = vadd.f32 %v1629, %v1677
        %1679 = vmatmul.bf16.gmra.mxu0 %v783
        %v1680 = vpop.f32.mrf.mxu0
        %v1681 = vadd.f32 %v1632, %v1680
        %v1682 = vpop.f32.mrf.mxu0
        %v1683 = vadd.f32 %v1634, %v1682
        %1684 = vmatmul.bf16.gmra.mxu0 %v792
        %v1685 = vpop.f32.mrf.mxu0
        %v1686 = vadd.f32 %v1637, %v1685
        %v1687 = vpop.f32.mrf.mxu0
        %v1688 = vadd.f32 %v1639, %v1687
        %1689 = vdwg.mxu0
        %1690 = vmatpush.bf16.msra.mxu0 %v1225
        %1691 = vmatpush.bf16.msra.mxu0 %v1224
        %1692 = vmatpush.bf16.msra.mxu0 %v1223
        %1693 = vmatpush.bf16.msra.mxu0 %v1222
        %1694 = vmatpush.bf16.msra.mxu0 %v1221
        %1695 = vmatpush.bf16.msra.mxu0 %v1220
        %1696 = vmatpush.bf16.msra.mxu0 %v1219
        %1697 = vmatpush.bf16.msra.mxu0 %v1218
        %1698 = vmatmul.bf16.gmra.mxu0 %v730
        %v1699 = vpop.f32.mrf.mxu0
        %v1700 = vadd.f32 %v1651, %v1699
        %v1701 = vpop.f32.mrf.mxu0
        %v1702 = vadd.f32 %v1653, %v1701
        %1703 = vmatmul.bf16.gmra.mxu0 %v739
        %v1704 = vpop.f32.mrf.mxu0
        %v1705 = vadd.f32 %v1656, %v1704
        %v1706 = vpop.f32.mrf.mxu0
        %v1707 = vadd.f32 %v1658, %v1706
        %1708 = vmatmul.bf16.gmra.mxu0 %v748
        %v1709 = vpop.f32.mrf.mxu0
        %v1710 = vadd.f32 %v1661, %v1709
        %v1711 = vpop.f32.mrf.mxu0
        %v1712 = vadd.f32 %v1663, %v1711
        %1713 = vmatmul.bf16.gmra.mxu0 %v757
        %v1714 = vpop.f32.mrf.mxu0
        %v1715 = vadd.f32 %v1666, %v1714
        %v1716 = vpop.f32.mrf.mxu0
        %v1717 = vadd.f32 %v1668, %v1716
        %1718 = vmatmul.bf16.gmra.mxu0 %v766
        %v1719 = vpop.f32.mrf.mxu0
        %v1720 = vadd.f32 %v1671, %v1719
        %v1721 = vpop.f32.mrf.mxu0
        %v1722 = vadd.f32 %v1673, %v1721
        %1723 = vmatmul.bf16.gmra.mxu0 %v775
        %v1724 = vpop.f32.mrf.mxu0
        %v1725 = vadd.f32 %v1676, %v1724
        %v1726 = vpop.f32.mrf.mxu0
        %v1727 = vadd.f32 %v1678, %v1726
        %1728 = vmatmul.bf16.gmra.mxu0 %v784
        %v1729 = vpop.f32.mrf.mxu0
        %v1730 = vadd.f32 %v1681, %v1729
        %v1731 = vpop.f32.mrf.mxu0
        %v1732 = vadd.f32 %v1683, %v1731
        %1733 = vmatmul.bf16.gmra.mxu0 %v793
        %v1734 = vpop.f32.mrf.mxu0
        %v1735 = vadd.f32 %v1686, %v1734
        %v1736 = vpop.f32.mrf.mxu0
        %v1737 = vadd.f32 %v1688, %v1736
        %1738 = vdwg.mxu0
        %v1739 = vmax.f32 %v1700, 0.0
        %v1740 = vmax.f32 %v1702, 0.0
        %v1741 = vmax.f32 %v1705, 0.0
        %v1742 = vmax.f32 %v1707, 0.0
        %v1743 = vmax.f32 %v1710, 0.0
        %v1744 = vmax.f32 %v1712, 0.0
        %v1745 = vmax.f32 %v1715, 0.0
        %v1746 = vmax.f32 %v1717, 0.0
        %v1747 = vmax.f32 %v1720, 0.0
        %v1748 = vmax.f32 %v1722, 0.0
        %v1749 = vmax.f32 %v1725, 0.0
        %v1750 = vmax.f32 %v1727, 0.0
        %v1751 = vmax.f32 %v1730, 0.0
        %v1752 = vmax.f32 %v1732, 0.0
        %v1753 = vmax.f32 %v1735, 0.0
        %v1754 = vmax.f32 %v1737, 0.0
        %v1755 = vpack.c.bf16 %v1740, %v1739
        %v1756 = vpack.c.bf16 %v1742, %v1741
        %v1757 = vpack.c.bf16 %v1744, %v1743
        %v1758 = vpack.c.bf16 %v1746, %v1745
        %v1759 = vpack.c.bf16 %v1748, %v1747
        %v1760 = vpack.c.bf16 %v1750, %v1749
        %v1761 = vpack.c.bf16 %v1752, %v1751
        %v1762 = vpack.c.bf16 %v1754, %v1753
        %v1763 = vld [vmem:[#allocation7] sm:$0xf]
        %v1764 = vld [vmem:[#allocation7 + $0x4] sm:$0xf]
        %v1765 = vld [vmem:[#allocation7 + $0x8] sm:$0xf]
        %v1766 = vld [vmem:[#allocation7 + $0xc] sm:$0xf]
        %v1767 = vld [vmem:[#allocation7 + $0x10] sm:$0xf]
        %v1768 = vld [vmem:[#allocation7 + $0x14] sm:$0xf]
        %v1769 = vld [vmem:[#allocation7 + $0x18] sm:$0xf]
        %v1770 = vld [vmem:[#allocation7 + $0x1c] sm:$0xf]
        %v1771 = vld [vmem:[#allocation7 + $0x20] sm:$0xf]
        %v1772 = vld [vmem:[#allocation7 + $0x24] sm:$0xf]
        %v1773 = vld [vmem:[#allocation7 + $0x28] sm:$0xf]
        %v1774 = vld [vmem:[#allocation7 + $0x2c] sm:$0xf]
        %v1775 = vld [vmem:[#allocation7 + $0x30] sm:$0xf]
        %v1776 = vld [vmem:[#allocation7 + $0x34] sm:$0xf]
        %v1777 = vld [vmem:[#allocation7 + $0x38] sm:$0xf]
        %v1778 = vld [vmem:[#allocation7 + $0x3c] sm:$0xf]
        %v1779 = vperm.slane %v350, 0
        %v1796 = vunpack.c.l.b16 %v1763
        %v1797 = vunpack.c.l.b16 %v1764
        %v1798 = vunpack.c.l.b16 %v1765
        %v1799 = vunpack.c.l.b16 %v1766
        %v1800 = vunpack.c.l.b16 %v1767
        %v1801 = vunpack.c.l.b16 %v1768
        %v1802 = vunpack.c.l.b16 %v1769
        %v1803 = vunpack.c.l.b16 %v1770
        %v1804 = vunpack.c.l.b16 %v1771
        %v1805 = vunpack.c.l.b16 %v1772
        %v1806 = vunpack.c.l.b16 %v1773
        %v1807 = vunpack.c.l.b16 %v1774
        %v1808 = vunpack.c.l.b16 %v1775
        %v1809 = vunpack.c.l.b16 %v1776
        %v1810 = vunpack.c.l.b16 %v1777
        %v1811 = vunpack.c.l.b16 %v1778
        %v1812 = vpack.c.b16 %v1797, %v1796
        %v1813 = vpack.c.b16 %v1799, %v1798
        %v1814 = vpack.c.b16 %v1801, %v1800
        %v1815 = vpack.c.b16 %v1803, %v1802
        %v1816 = vpack.c.b16 %v1805, %v1804
        %v1817 = vpack.c.b16 %v1807, %v1806
        %v1818 = vpack.c.b16 %v1809, %v1808
        %v1819 = vpack.c.b16 %v1811, %v1810
        %1828 = vmatpush.bf16.msra.mxu0 %v1819
        %1829 = vmatpush.bf16.msra.mxu0 %v1818
        %1830 = vmatpush.bf16.msra.mxu0 %v1817
        %1831 = vmatpush.bf16.msra.mxu0 %v1816
        %1832 = vmatpush.bf16.msra.mxu0 %v1815
        %1833 = vmatpush.bf16.msra.mxu0 %v1814
        %1834 = vmatpush.bf16.msra.mxu0 %v1813
        %1835 = vmatpush.bf16.msra.mxu0 %v1812
        %1836 = vmatmul.bf16.gmra.mxu0 %v1755
        %v1837 = vpop.f32.mrf.mxu0
        %v1838 = vadd.f32 %v1779, %v1837
        %v1839 = vpop.f32.mrf.mxu0
        %v1840 = vadd.f32 %v1779, %v1839
        %1841 = vmatmul.bf16.gmra.mxu0 %v1756
        %v1842 = vpop.f32.mrf.mxu0
        %v1843 = vadd.f32 %v1779, %v1842
        %v1844 = vpop.f32.mrf.mxu0
        %v1845 = vadd.f32 %v1779, %v1844
        %1846 = vmatmul.bf16.gmra.mxu0 %v1757
        %v1847 = vpop.f32.mrf.mxu0
        %v1848 = vadd.f32 %v1779, %v1847
        %v1849 = vpop.f32.mrf.mxu0
        %v1850 = vadd.f32 %v1779, %v1849
        %1851 = vmatmul.bf16.gmra.mxu0 %v1758
        %v1852 = vpop.f32.mrf.mxu0
        %v1853 = vadd.f32 %v1779, %v1852
        %v1854 = vpop.f32.mrf.mxu0
        %v1855 = vadd.f32 %v1779, %v1854
        %1856 = vmatmul.bf16.gmra.mxu0 %v1759
        %v1857 = vpop.f32.mrf.mxu0
        %v1858 = vadd.f32 %v1779, %v1857
        %v1859 = vpop.f32.mrf.mxu0
        %v1860 = vadd.f32 %v1779, %v1859
        %1861 = vmatmul.bf16.gmra.mxu0 %v1760
        %v1862 = vpop.f32.mrf.mxu0
        %v1863 = vadd.f32 %v1779, %v1862
        %v1864 = vpop.f32.mrf.mxu0
        %v1865 = vadd.f32 %v1779, %v1864
        %1866 = vmatmul.bf16.gmra.mxu0 %v1761
        %v1867 = vpop.f32.mrf.mxu0
        %v1868 = vadd.f32 %v1779, %v1867
        %v1869 = vpop.f32.mrf.mxu0
        %v1870 = vadd.f32 %v1779, %v1869
        %1871 = vmatmul.bf16.gmra.mxu0 %v1762
        %v1872 = vpop.f32.mrf.mxu0
        %v1873 = vadd.f32 %v1779, %v1872
        %v1874 = vpop.f32.mrf.mxu0
        %v1875 = vadd.f32 %v1779, %v1874
        %1876 = vdwg.mxu0
        %v1877 = vmax.f32 %v1838, 0.0
        %v1878 = vmax.f32 %v1840, 0.0
        %v1879 = vmax.f32 %v1843, 0.0
        %v1880 = vmax.f32 %v1845, 0.0
        %v1881 = vmax.f32 %v1848, 0.0
        %v1882 = vmax.f32 %v1850, 0.0
        %v1883 = vmax.f32 %v1853, 0.0
        %v1884 = vmax.f32 %v1855, 0.0
        %v1885 = vmax.f32 %v1858, 0.0
        %v1886 = vmax.f32 %v1860, 0.0
        %v1887 = vmax.f32 %v1863, 0.0
        %v1888 = vmax.f32 %v1865, 0.0
        %v1889 = vmax.f32 %v1868, 0.0
        %v1890 = vmax.f32 %v1870, 0.0
        %v1891 = vmax.f32 %v1873, 0.0
        %v1892 = vmax.f32 %v1875, 0.0
        %v1893 = vpack.c.bf16 %v1878, %v1877
        %v1894 = vpack.c.bf16 %v1880, %v1879
        %v1895 = vpack.c.bf16 %v1882, %v1881
        %v1896 = vpack.c.bf16 %v1884, %v1883
        %v1897 = vpack.c.bf16 %v1886, %v1885
        %v1898 = vpack.c.bf16 %v1888, %v1887
        %v1899 = vpack.c.bf16 %v1890, %v1889
        %v1900 = vpack.c.bf16 %v1892, %v1891
        %s1901 = scalar_lea.vmem [#allocation7], 64
        %v1902 = vld [vmem:[%s1901] sm:$0xf]
        %v1903 = vld [vmem:[%s1901 + $0x4] sm:$0xf]
        %v1904 = vld [vmem:[%s1901 + $0x8] sm:$0xf]
        %v1905 = vld [vmem:[%s1901 + $0xc] sm:$0xf]
        %v1906 = vld [vmem:[%s1901 + $0x10] sm:$0xf]
        %v1907 = vld [vmem:[%s1901 + $0x14] sm:$0xf]
        %v1908 = vld [vmem:[%s1901 + $0x18] sm:$0xf]
        %v1909 = vld [vmem:[%s1901 + $0x1c] sm:$0xf]
        %v1910 = vld [vmem:[%s1901 + $0x20] sm:$0xf]
        %v1911 = vld [vmem:[%s1901 + $0x24] sm:$0xf]
        %v1912 = vld [vmem:[%s1901 + $0x28] sm:$0xf]
        %v1913 = vld [vmem:[%s1901 + $0x2c] sm:$0xf]
        %v1914 = vld [vmem:[%s1901 + $0x30] sm:$0xf]
        %v1915 = vld [vmem:[%s1901 + $0x34] sm:$0xf]
        %v1916 = vld [vmem:[%s1901 + $0x38] sm:$0xf]
        %v1917 = vld [vmem:[%s1901 + $0x3c] sm:$0xf]
        %v1918 = vperm.slane %v351, 0
        %v1935 = vunpack.c.l.b16 %v1902
        %v1936 = vunpack.c.l.b16 %v1903
        %v1937 = vunpack.c.l.b16 %v1904
        %v1938 = vunpack.c.l.b16 %v1905
        %v1939 = vunpack.c.l.b16 %v1906
        %v1940 = vunpack.c.l.b16 %v1907
        %v1941 = vunpack.c.l.b16 %v1908
        %v1942 = vunpack.c.l.b16 %v1909
        %v1943 = vunpack.c.l.b16 %v1910
        %v1944 = vunpack.c.l.b16 %v1911
        %v1945 = vunpack.c.l.b16 %v1912
        %v1946 = vunpack.c.l.b16 %v1913
        %v1947 = vunpack.c.l.b16 %v1914
        %v1948 = vunpack.c.l.b16 %v1915
        %v1949 = vunpack.c.l.b16 %v1916
        %v1950 = vunpack.c.l.b16 %v1917
        %v1951 = vpack.c.b16 %v1936, %v1935
        %v1952 = vpack.c.b16 %v1938, %v1937
        %v1953 = vpack.c.b16 %v1940, %v1939
        %v1954 = vpack.c.b16 %v1942, %v1941
        %v1955 = vpack.c.b16 %v1944, %v1943
        %v1956 = vpack.c.b16 %v1946, %v1945
        %v1957 = vpack.c.b16 %v1948, %v1947
        %v1958 = vpack.c.b16 %v1950, %v1949
        %1967 = vmatpush.bf16.msra.mxu0 %v1958
        %1968 = vmatpush.bf16.msra.mxu0 %v1957
        %1969 = vmatpush.bf16.msra.mxu0 %v1956
        %1970 = vmatpush.bf16.msra.mxu0 %v1955
        %1971 = vmatpush.bf16.msra.mxu0 %v1954
        %1972 = vmatpush.bf16.msra.mxu0 %v1953
        %1973 = vmatpush.bf16.msra.mxu0 %v1952
        %1974 = vmatpush.bf16.msra.mxu0 %v1951
        %1975 = vmatmul.bf16.gmra.mxu0 %v1893
        %v1976 = vpop.f32.mrf.mxu0
        %v1977 = vadd.f32 %v1918, %v1976
        %v1978 = vpop.f32.mrf.mxu0
        %v1979 = vadd.f32 %v1918, %v1978
        %1980 = vmatmul.bf16.gmra.mxu0 %v1894
        %v1981 = vpop.f32.mrf.mxu0
        %v1982 = vadd.f32 %v1918, %v1981
        %v1983 = vpop.f32.mrf.mxu0
        %v1984 = vadd.f32 %v1918, %v1983
        %1985 = vmatmul.bf16.gmra.mxu0 %v1895
        %v1986 = vpop.f32.mrf.mxu0
        %v1987 = vadd.f32 %v1918, %v1986
        %v1988 = vpop.f32.mrf.mxu0
        %v1989 = vadd.f32 %v1918, %v1988
        %1990 = vmatmul.bf16.gmra.mxu0 %v1896
        %v1991 = vpop.f32.mrf.mxu0
        %v1992 = vadd.f32 %v1918, %v1991
        %v1993 = vpop.f32.mrf.mxu0
        %v1994 = vadd.f32 %v1918, %v1993
        %1995 = vmatmul.bf16.gmra.mxu0 %v1897
        %v1996 = vpop.f32.mrf.mxu0
        %v1997 = vadd.f32 %v1918, %v1996
        %v1998 = vpop.f32.mrf.mxu0
        %v1999 = vadd.f32 %v1918, %v1998
        %2000 = vmatmul.bf16.gmra.mxu0 %v1898
        %v2001 = vpop.f32.mrf.mxu0
        %v2002 = vadd.f32 %v1918, %v2001
        %v2003 = vpop.f32.mrf.mxu0
        %v2004 = vadd.f32 %v1918, %v2003
        %2005 = vmatmul.bf16.gmra.mxu0 %v1899
        %v2006 = vpop.f32.mrf.mxu0
        %v2007 = vadd.f32 %v1918, %v2006
        %v2008 = vpop.f32.mrf.mxu0
        %v2009 = vadd.f32 %v1918, %v2008
        %2010 = vmatmul.bf16.gmra.mxu0 %v1900
        %v2011 = vpop.f32.mrf.mxu0
        %v2012 = vadd.f32 %v1918, %v2011
        %v2013 = vpop.f32.mrf.mxu0
        %v2014 = vadd.f32 %v1918, %v2013
        %2015 = vdwg.mxu0
        %v2016 = vmax.f32 %v1977, 0.0
        %v2017 = vmax.f32 %v1979, 0.0
        %v2018 = vmax.f32 %v1982, 0.0
        %v2019 = vmax.f32 %v1984, 0.0
        %v2020 = vmax.f32 %v1987, 0.0
        %v2021 = vmax.f32 %v1989, 0.0
        %v2022 = vmax.f32 %v1992, 0.0
        %v2023 = vmax.f32 %v1994, 0.0
        %v2024 = vmax.f32 %v1997, 0.0
        %v2025 = vmax.f32 %v1999, 0.0
        %v2026 = vmax.f32 %v2002, 0.0
        %v2027 = vmax.f32 %v2004, 0.0
        %v2028 = vmax.f32 %v2007, 0.0
        %v2029 = vmax.f32 %v2009, 0.0
        %v2030 = vmax.f32 %v2012, 0.0
        %v2031 = vmax.f32 %v2014, 0.0
        %v2032 = vpack.c.bf16 %v2017, %v2016
        %v2033 = vpack.c.bf16 %v2019, %v2018
        %v2034 = vpack.c.bf16 %v2021, %v2020
        %v2035 = vpack.c.bf16 %v2023, %v2022
        %v2036 = vpack.c.bf16 %v2025, %v2024
        %v2037 = vpack.c.bf16 %v2027, %v2026
        %v2038 = vpack.c.bf16 %v2029, %v2028
        %v2039 = vpack.c.bf16 %v2031, %v2030
        %s2040 = scalar_lea.vmem [#allocation7], 128
        %v2041 = vld [vmem:[%s2040] sm:$0xf]
        %v2042 = vld [vmem:[%s2040 + $0x4] sm:$0xf]
        %v2043 = vld [vmem:[%s2040 + $0x8] sm:$0xf]
        %v2044 = vld [vmem:[%s2040 + $0xc] sm:$0xf]
        %v2045 = vld [vmem:[%s2040 + $0x10] sm:$0xf]
        %v2046 = vld [vmem:[%s2040 + $0x14] sm:$0xf]
        %v2047 = vld [vmem:[%s2040 + $0x18] sm:$0xf]
        %v2048 = vld [vmem:[%s2040 + $0x1c] sm:$0xf]
        %v2049 = vld [vmem:[%s2040 + $0x20] sm:$0xf]
        %v2050 = vld [vmem:[%s2040 + $0x24] sm:$0xf]
        %v2051 = vld [vmem:[%s2040 + $0x28] sm:$0xf]
        %v2052 = vld [vmem:[%s2040 + $0x2c] sm:$0xf]
        %v2053 = vld [vmem:[%s2040 + $0x30] sm:$0xf]
        %v2054 = vld [vmem:[%s2040 + $0x34] sm:$0xf]
        %v2055 = vld [vmem:[%s2040 + $0x38] sm:$0xf]
        %v2056 = vld [vmem:[%s2040 + $0x3c] sm:$0xf]
        %v2057 = vperm.slane %v352, 0
        %v2074 = vunpack.c.l.b16 %v2041
        %v2075 = vunpack.c.l.b16 %v2042
        %v2076 = vunpack.c.l.b16 %v2043
        %v2077 = vunpack.c.l.b16 %v2044
        %v2078 = vunpack.c.l.b16 %v2045
        %v2079 = vunpack.c.l.b16 %v2046
        %v2080 = vunpack.c.l.b16 %v2047
        %v2081 = vunpack.c.l.b16 %v2048
        %v2082 = vunpack.c.l.b16 %v2049
        %v2083 = vunpack.c.l.b16 %v2050
        %v2084 = vunpack.c.l.b16 %v2051
        %v2085 = vunpack.c.l.b16 %v2052
        %v2086 = vunpack.c.l.b16 %v2053
        %v2087 = vunpack.c.l.b16 %v2054
        %v2088 = vunpack.c.l.b16 %v2055
        %v2089 = vunpack.c.l.b16 %v2056
        %v2090 = vpack.c.b16 %v2075, %v2074
        %v2091 = vpack.c.b16 %v2077, %v2076
        %v2092 = vpack.c.b16 %v2079, %v2078
        %v2093 = vpack.c.b16 %v2081, %v2080
        %v2094 = vpack.c.b16 %v2083, %v2082
        %v2095 = vpack.c.b16 %v2085, %v2084
        %v2096 = vpack.c.b16 %v2087, %v2086
        %v2097 = vpack.c.b16 %v2089, %v2088
        %2106 = vmatpush.bf16.msra.mxu0 %v2097
        %2107 = vmatpush.bf16.msra.mxu0 %v2096
        %2108 = vmatpush.bf16.msra.mxu0 %v2095
        %2109 = vmatpush.bf16.msra.mxu0 %v2094
        %2110 = vmatpush.bf16.msra.mxu0 %v2093
        %2111 = vmatpush.bf16.msra.mxu0 %v2092
        %2112 = vmatpush.bf16.msra.mxu0 %v2091
        %2113 = vmatpush.bf16.msra.mxu0 %v2090
        %2114 = vmatmul.bf16.gmra.mxu0 %v2032
        %v2115 = vpop.f32.mrf.mxu0
        %v2116 = vadd.f32 %v2057, %v2115
        %v2117 = vpop.f32.mrf.mxu0
        %v2118 = vadd.f32 %v2057, %v2117
        %2119 = vmatmul.bf16.gmra.mxu0 %v2033
        %v2120 = vpop.f32.mrf.mxu0
        %v2121 = vadd.f32 %v2057, %v2120
        %v2122 = vpop.f32.mrf.mxu0
        %v2123 = vadd.f32 %v2057, %v2122
        %2124 = vmatmul.bf16.gmra.mxu0 %v2034
        %v2125 = vpop.f32.mrf.mxu0
        %v2126 = vadd.f32 %v2057, %v2125
        %v2127 = vpop.f32.mrf.mxu0
        %v2128 = vadd.f32 %v2057, %v2127
        %2129 = vmatmul.bf16.gmra.mxu0 %v2035
        %v2130 = vpop.f32.mrf.mxu0
        %v2131 = vadd.f32 %v2057, %v2130
        %v2132 = vpop.f32.mrf.mxu0
        %v2133 = vadd.f32 %v2057, %v2132
        %2134 = vmatmul.bf16.gmra.mxu0 %v2036
        %v2135 = vpop.f32.mrf.mxu0
        %v2136 = vadd.f32 %v2057, %v2135
        %v2137 = vpop.f32.mrf.mxu0
        %v2138 = vadd.f32 %v2057, %v2137
        %2139 = vmatmul.bf16.gmra.mxu0 %v2037
        %v2140 = vpop.f32.mrf.mxu0
        %v2141 = vadd.f32 %v2057, %v2140
        %v2142 = vpop.f32.mrf.mxu0
        %v2143 = vadd.f32 %v2057, %v2142
        %2144 = vmatmul.bf16.gmra.mxu0 %v2038
        %v2145 = vpop.f32.mrf.mxu0
        %v2146 = vadd.f32 %v2057, %v2145
        %v2147 = vpop.f32.mrf.mxu0
        %v2148 = vadd.f32 %v2057, %v2147
        %2149 = vmatmul.bf16.gmra.mxu0 %v2039
        %v2150 = vpop.f32.mrf.mxu0
        %v2151 = vadd.f32 %v2057, %v2150
        %v2152 = vpop.f32.mrf.mxu0
        %v2153 = vadd.f32 %v2057, %v2152
        %2154 = vdwg.mxu0
        %v2155 = vlaneseq
        %v2156 = vand.u32 %v2155, 127
        %vm2157 = vcmp.lt.s32.totalorder %v2156, 10
        %v2158 = vsel %vm2157, %v2116, 0.0
        %v2159 = vsel %vm2157, %v2118, 0.0
        %v2160 = vsel %vm2157, %v2121, 0.0
        %v2161 = vsel %vm2157, %v2123, 0.0
        %v2162 = vsel %vm2157, %v2126, 0.0
        %v2163 = vsel %vm2157, %v2128, 0.0
        %v2164 = vsel %vm2157, %v2131, 0.0
        %v2165 = vsel %vm2157, %v2133, 0.0
        %v2166 = vsel %vm2157, %v2136, 0.0
        %v2167 = vsel %vm2157, %v2138, 0.0
        %v2168 = vsel %vm2157, %v2141, 0.0
        %v2169 = vsel %vm2157, %v2143, 0.0
        %v2170 = vsel %vm2157, %v2146, 0.0
        %v2171 = vsel %vm2157, %v2148, 0.0
        %v2172 = vsel %vm2157, %v2151, 0.0
        %v2173 = vsel %vm2157, %v2153, 0.0
        %2174 = vadd.xlane.f32.xlu0 %v2158
        %v2175 = vpop.xlane.xlu0 %2174
        %2176 = vadd.xlane.f32.xlu0 %v2159
        %v2177 = vpop.xlane.xlu0 %2176
        %2178 = vadd.xlane.f32.xlu0 %v2160
        %v2179 = vpop.xlane.xlu0 %2178
        %2180 = vadd.xlane.f32.xlu0 %v2161
        %v2181 = vpop.xlane.xlu0 %2180
        %2182 = vadd.xlane.f32.xlu0 %v2162
        %v2183 = vpop.xlane.xlu0 %2182
        %2184 = vadd.xlane.f32.xlu0 %v2163
        %v2185 = vpop.xlane.xlu0 %2184
        %2186 = vadd.xlane.f32.xlu0 %v2164
        %v2187 = vpop.xlane.xlu0 %2186
        %2188 = vadd.xlane.f32.xlu0 %v2165
        %v2189 = vpop.xlane.xlu0 %2188
        %2190 = vadd.xlane.f32.xlu0 %v2166
        %v2191 = vpop.xlane.xlu0 %2190
        %2192 = vadd.xlane.f32.xlu0 %v2167
        %v2193 = vpop.xlane.xlu0 %2192
        %2194 = vadd.xlane.f32.xlu0 %v2168
        %v2195 = vpop.xlane.xlu0 %2194
        %2196 = vadd.xlane.f32.xlu0 %v2169
        %v2197 = vpop.xlane.xlu0 %2196
        %2198 = vadd.xlane.f32.xlu0 %v2170
        %v2199 = vpop.xlane.xlu0 %2198
        %2200 = vadd.xlane.f32.xlu0 %v2171
        %v2201 = vpop.xlane.xlu0 %2200
        %2202 = vadd.xlane.f32.xlu0 %v2172
        %v2203 = vpop.xlane.xlu0 %2202
        %2204 = vadd.xlane.f32.xlu0 %v2173
        %v2205 = vpop.xlane.xlu0 %2204
        %v2206 = vmul.f32 %v2175, 0.1
        %v2207 = vmul.f32 %v2177, 0.1
        %v2208 = vmul.f32 %v2179, 0.1
        %v2209 = vmul.f32 %v2181, 0.1
        %v2210 = vmul.f32 %v2183, 0.1
        %v2211 = vmul.f32 %v2185, 0.1
        %v2212 = vmul.f32 %v2187, 0.1
        %v2213 = vmul.f32 %v2189, 0.1
        %v2214 = vmul.f32 %v2191, 0.1
        %v2215 = vmul.f32 %v2193, 0.1
        %v2216 = vmul.f32 %v2195, 0.1
        %v2217 = vmul.f32 %v2197, 0.1
        %v2218 = vmul.f32 %v2199, 0.1
        %v2219 = vmul.f32 %v2201, 0.1
        %v2220 = vmul.f32 %v2203, 0.1
        %v2221 = vmul.f32 %v2205, 0.1
        %vm2222 = vcmp.eq.s32.totalorder %v2156, 10
        %v2223 = vsel %vm2222, %v2116, 0.0
        %v2224 = vsel %vm2222, %v2118, 0.0
        %v2225 = vsel %vm2222, %v2121, 0.0
        %v2226 = vsel %vm2222, %v2123, 0.0
        %v2227 = vsel %vm2222, %v2126, 0.0
        %v2228 = vsel %vm2222, %v2128, 0.0
        %v2229 = vsel %vm2222, %v2131, 0.0
        %v2230 = vsel %vm2222, %v2133, 0.0
        %v2231 = vsel %vm2222, %v2136, 0.0
        %v2232 = vsel %vm2222, %v2138, 0.0
        %v2233 = vsel %vm2222, %v2141, 0.0
        %v2234 = vsel %vm2222, %v2143, 0.0
        %v2235 = vsel %vm2222, %v2146, 0.0
        %v2236 = vsel %vm2222, %v2148, 0.0
        %v2237 = vsel %vm2222, %v2151, 0.0
        %v2238 = vsel %vm2222, %v2153, 0.0
        %2239 = vadd.xlane.f32.xlu0 %v2223
        %v2240 = vpop.xlane.xlu0 %2239
        %2241 = vadd.xlane.f32.xlu0 %v2224
        %v2242 = vpop.xlane.xlu0 %2241
        %2243 = vadd.xlane.f32.xlu0 %v2225
        %v2244 = vpop.xlane.xlu0 %2243
        %2245 = vadd.xlane.f32.xlu0 %v2226
        %v2246 = vpop.xlane.xlu0 %2245
        %2247 = vadd.xlane.f32.xlu0 %v2227
        %v2248 = vpop.xlane.xlu0 %2247
        %2249 = vadd.xlane.f32.xlu0 %v2228
        %v2250 = vpop.xlane.xlu0 %2249
        %2251 = vadd.xlane.f32.xlu0 %v2229
        %v2252 = vpop.xlane.xlu0 %2251
        %2253 = vadd.xlane.f32.xlu0 %v2230
        %v2254 = vpop.xlane.xlu0 %2253
        %2255 = vadd.xlane.f32.xlu0 %v2231
        %v2256 = vpop.xlane.xlu0 %2255
        %2257 = vadd.xlane.f32.xlu0 %v2232
        %v2258 = vpop.xlane.xlu0 %2257
        %2259 = vadd.xlane.f32.xlu0 %v2233
        %v2260 = vpop.xlane.xlu0 %2259
        %2261 = vadd.xlane.f32.xlu0 %v2234
        %v2262 = vpop.xlane.xlu0 %2261
        %2263 = vadd.xlane.f32.xlu0 %v2235
        %v2264 = vpop.xlane.xlu0 %2263
        %2265 = vadd.xlane.f32.xlu0 %v2236
        %v2266 = vpop.xlane.xlu0 %2265
        %2267 = vadd.xlane.f32.xlu0 %v2237
        %v2268 = vpop.xlane.xlu0 %2267
        %2269 = vadd.xlane.f32.xlu0 %v2238
        %v2270 = vpop.xlane.xlu0 %2269
        %v2271 = vadd.f32 %v2116, %v2240
        %v2272 = vadd.f32 %v2118, %v2242
        %v2273 = vadd.f32 %v2121, %v2244
        %v2274 = vadd.f32 %v2123, %v2246
        %v2275 = vadd.f32 %v2126, %v2248
        %v2276 = vadd.f32 %v2128, %v2250
        %v2277 = vadd.f32 %v2131, %v2252
        %v2278 = vadd.f32 %v2133, %v2254
        %v2279 = vadd.f32 %v2136, %v2256
        %v2280 = vadd.f32 %v2138, %v2258
        %v2281 = vadd.f32 %v2141, %v2260
        %v2282 = vadd.f32 %v2143, %v2262
        %v2283 = vadd.f32 %v2146, %v2264
        %v2284 = vadd.f32 %v2148, %v2266
        %v2285 = vadd.f32 %v2151, %v2268
        %v2286 = vadd.f32 %v2153, %v2270
        %v2287 = vsub.f32 %v2271, %v2206
        %v2288 = vsub.f32 %v2272, %v2207
        %v2289 = vsub.f32 %v2273, %v2208
        %v2290 = vsub.f32 %v2274, %v2209
        %v2291 = vsub.f32 %v2275, %v2210
        %v2292 = vsub.f32 %v2276, %v2211
        %v2293 = vsub.f32 %v2277, %v2212
        %v2294 = vsub.f32 %v2278, %v2213
        %v2295 = vsub.f32 %v2279, %v2214
        %v2296 = vsub.f32 %v2280, %v2215
        %v2297 = vsub.f32 %v2281, %v2216
        %v2298 = vsub.f32 %v2282, %v2217
        %v2299 = vsub.f32 %v2283, %v2218
        %v2300 = vsub.f32 %v2284, %v2219
        %v2301 = vsub.f32 %v2285, %v2220
        %v2302 = vsub.f32 %v2286, %v2221
        %v2303 = vsel %vm2157, %v2287, 0.0
        %v2304 = vsel %vm2157, %v2288, 0.0
        %v2305 = vsel %vm2157, %v2289, 0.0
        %v2306 = vsel %vm2157, %v2290, 0.0
        %v2307 = vsel %vm2157, %v2291, 0.0
        %v2308 = vsel %vm2157, %v2292, 0.0
        %v2309 = vsel %vm2157, %v2293, 0.0
        %v2310 = vsel %vm2157, %v2294, 0.0
        %v2311 = vsel %vm2157, %v2295, 0.0
        %v2312 = vsel %vm2157, %v2296, 0.0
        %v2313 = vsel %vm2157, %v2297, 0.0
        %v2314 = vsel %vm2157, %v2298, 0.0
        %v2315 = vsel %vm2157, %v2299, 0.0
        %v2316 = vsel %vm2157, %v2300, 0.0
        %v2317 = vsel %vm2157, %v2301, 0.0
        %v2318 = vsel %vm2157, %v2302, 0.0
        %2319 = vst [vmem:[%s266] sm:$0xff] %v2303
        %2320 = vst [vmem:[%s266 + $0x8] sm:$0xff] %v2304
        %2321 = vst [vmem:[%s266 + $0x10] sm:$0xff] %v2305
        %2322 = vst [vmem:[%s266 + $0x18] sm:$0xff] %v2306
        %2323 = vst [vmem:[%s266 + $0x20] sm:$0xff] %v2307
        %2324 = vst [vmem:[%s266 + $0x28] sm:$0xff] %v2308
        %2325 = vst [vmem:[%s266 + $0x30] sm:$0xff] %v2309
        %2326 = vst [vmem:[%s266 + $0x38] sm:$0xff] %v2310
        %2327 = vst [vmem:[%s266 + $0x40] sm:$0xff] %v2311
        %2328 = vst [vmem:[%s266 + $0x48] sm:$0xff] %v2312
        %2329 = vst [vmem:[%s266 + $0x50] sm:$0xff] %v2313
        %2330 = vst [vmem:[%s266 + $0x58] sm:$0xff] %v2314
        %2331 = vst [vmem:[%s266 + $0x60] sm:$0xff] %v2315
        %2332 = vst [vmem:[%s266 + $0x68] sm:$0xff] %v2316
        %2333 = vst [vmem:[%s266 + $0x70] sm:$0xff] %v2317
        %2334 = vst [vmem:[%s266 + $0x78] sm:$0xff] %v2318
        %s2335 = sand.u32 %s120, 1
        %s2336 = scalar_lea.sflag [#allocation4], %s2335
        %s2337 = sand.u32 %s120, 1
        %s2338 = smul.addr %s2337, 128
        %s2339 = scalar_lea.vmem [#allocation10], %s2338
        // Predicated region
        $region53: #{tpu_custom_call.1} parent=35 // pred_check
          %p2340 = pneg %p130
        $region54: #{tpu_custom_call.1} parent=35 // pred_check_branch
          %2342 = sbr.rel (%p2340) target = $region56
        $region55: #{tpu_custom_call.1} parent=35 // pred_region
          %s2343 = smul.u32 16, %s23
          %2345 = vsyncadd %s2336, 0
          %s2346 = smul.addr %s2343, 8
          %s2347 = scalar_lea.hbm %s4, %s2346
          %s2348 = sshll.u32 %s2339, 4
          %s2349 = int_to_ptr.vmem [resolvable:$true] %s2348
          %s2350 = sshll.u32 %s2347, 4
          %s2351 = int_to_ptr.hbm [resolvable:$true] %s2350
          %2356 = dma.vmem_to_hbm [thread:$0]  %s2349, 2048, %s2351, %s2336, 128, 128, 8
        $region56: #{tpu_custom_call.1} parent=35 // pred_fallthru
          _
      $region36: #{tpu_custom_call.1} parent=5 // pred_fallthru
        _
      %p2357 = scmp.le.s32.totalorder 2, %s18
      // Predicated region
      $region57: #{tpu_custom_call.1} parent=5 // pred_check
        %p2358 = pneg %p2357
      $region58: #{tpu_custom_call.1} parent=5 // pred_check_branch
        %2360 = sbr.rel (%p2358) target = $region60
      $region59: #{tpu_custom_call.1} parent=5 // pred_region
        %s2361 = ssub.s32 %s18, 2
        // Predicated region
        $region61: #{tpu_custom_call.1} parent=59 // pred_check
          %p2362 = pneg %p136
        $region62: #{tpu_custom_call.1} parent=59 // pred_check_branch
          %2364 = sbr.rel (%p2362) target = $region64
        $region63: #{tpu_custom_call.1} parent=59 // pred_region
          %s2365 = sand.u32 %s121, 1
          %s2366 = scalar_lea.sflag [#allocation4], %s2365
          %s2367 = sand.u32 %s121, 1
          %s2368 = smul.addr %s2367, 128
          %s2369 = scalar_lea.vmem [#allocation10], %s2368
          %2371 = dma.done %s2366, 2048
        $region64: #{tpu_custom_call.1} parent=59 // pred_fallthru
          _
      $region60: #{tpu_custom_call.1} parent=5 // pred_fallthru
        _
    $region6: #{tpu_custom_call.1} parent=1 // loop_footer
      %s22 = sadd.s32 1, %s18
    $region7: #{tpu_custom_call.1} parent=1 // loop_footer_branch
      %17 = sbr.rel target = $region3
    $region8: #{tpu_custom_call.1} parent=1 // loop_exit
      _
    %2372 = vsyncpa [#allocation3], 1
    %s2373 = scalar_lea.sflag [#allocation3], 1
    %2374 = vsyncpa %s2373, 1
    %2375 = vsyncpa [#allocation6], 1
    %2376 = vsyncpa [#allocation9], 1
    %2377 = vsyncpa [#allocation4], 1
    %s2378 = scalar_lea.sflag [#allocation4], 1
    %2379 = vsyncpa %s2378, 1

</llo_original>
